<compile_context>
chip_gen: v7x
topology: tpu7x:2x2x1
jax: 0.10.0
libtpu: 0.0.40
codegen_flags: <defaults>
</compile_context>

<pallas_src>
import functools
import math

import jax
import jax.numpy as jnp
from jax.experimental import pallas as pl
from jax.experimental.pallas import tpu as pltpu


def round_up(x, m):
    return ((x + m - 1) // m) * m


# ----------------------------------------------------------------------------
# Kernel: whole decoder step, single grid point, everything VMEM-resident.
# ----------------------------------------------------------------------------
def decoder_kernel(emb_ref, h0_ref, enc_ref,
                   awh_ref, awe_ref, ab_ref, v_ref,
                   wih_ref, whh_ref, bih_ref, bhh_ref,
                   wout_ref, ob_ref,
                   logp_ref, hnew_ref, attnw_ref,
                   *, b_real, v_real, h_pad):
    T, B, H = enc_ref.shape          # padded B (sublane-mult-8), padded H (lane-mult-128)
    V = wout_ref.shape[1]            # padded V

    embedded = emb_ref[...]                                        # (B, E_pad), gathered in wrapper
    h_last = h0_ref[...]                                           # (B, H)
    enc = enc_ref[...]                                             # (T, B, H)
    enc_flat = enc.reshape(T * B, H)                               # layout-free reshape

    # ---- attention energies in (T, B, H) layout (no transpose) ----
    h_part = jnp.dot(h_last, awh_ref[...],
                     preferred_element_type=jnp.float32)           # (B, H)
    e_part = jnp.dot(enc_flat, awe_ref[...],
                     preferred_element_type=jnp.float32)           # (T*B, H)
    energy = e_part.reshape(T, B, H) + h_part + ab_ref[...]        # broadcast -> (T, B, H)

    # legacy F.softmax (no dim) on a 3-D tensor -> softmax over the batch axis.
    # Mask padded batch rows so they don't contribute to the denominator.
    b_mask = jax.lax.broadcasted_iota(jnp.int32, (B, 1), 0) < b_real
    energy = jnp.where(b_mask, energy, -1e30)
    e_max = jnp.max(energy, axis=1, keepdims=True)
    e_exp = jnp.exp(energy - e_max)
    inv_den = 1.0 / jnp.sum(e_exp, axis=1, keepdims=True)          # (T,1,H): T*H divides only
    sm = e_exp * inv_den                                           # (T, B, H)

    # attn_e[t,b] = relu(sum_h v[h] * sm[t,b,h]) -- lane reduce (XLU), lane-dense output.
    weighted = sm * v_ref[...]                                     # (T, B, H), v is (1, H)
    attn_keep = jnp.maximum(jnp.sum(weighted, axis=-1, keepdims=True), 0.0)  # (T, B, 1)
    attnw_ref[...] = jnp.maximum(jnp.sum(weighted, axis=-1), 0.0)  # (T, B)

    # context[b,h] = sum_t attn[t,b] * enc[t,b,h]  -- leading-axis reduction.
    context = jnp.sum(attn_keep * enc, axis=0)                     # (B, H)

    # ---- GRU cell: 2 fused matmuls (gates stacked on the lane axis, order r,z,n) ----
    x_cat = jnp.concatenate([embedded, context], axis=1)           # (B, E_pad + H_pad)
    gi = jnp.dot(x_cat, wih_ref[...],
                 preferred_element_type=jnp.float32) + bih_ref[...]   # (B, 3*H_pad)
    gh = jnp.dot(h_last, whh_ref[...],
                 preferred_element_type=jnp.float32) + bhh_ref[...]   # (B, 3*H_pad)

    HP = h_pad
    r = jax.nn.sigmoid(gi[:, 0 * HP:1 * HP] + gh[:, 0 * HP:1 * HP])
    z = jax.nn.sigmoid(gi[:, 1 * HP:2 * HP] + gh[:, 1 * HP:2 * HP])
    n = jnp.tanh(gi[:, 2 * HP:3 * HP] + r * gh[:, 2 * HP:3 * HP])
    h_new = (1.0 - z) * n + z * h_last                             # (B, H), padded lanes stay 0
    hnew_ref[...] = h_new

    # ---- output projection (single fused matmul) + log_softmax over real vocab ----
    y_cat = jnp.concatenate([h_new, context], axis=1)              # (B, 2*H_pad)
    logits = jnp.dot(y_cat, wout_ref[...],
                     preferred_element_type=jnp.float32) + ob_ref[...]   # (B, V)
    v_mask = jax.lax.broadcasted_iota(jnp.int32, (1, V), 1) < v_real
    logits = jnp.where(v_mask, logits, -1e30)
    l_max = jnp.max(logits, axis=1, keepdims=True)
    shifted = logits - l_max
    lse = jnp.log(jnp.sum(jnp.exp(shifted), axis=1, keepdims=True))
    logp_ref[...] = shifted - lse


# ----------------------------------------------------------------------------
# Wrapper: pads to TPU-friendly shapes, calls the kernel, slices back.
# ----------------------------------------------------------------------------
def decoder_forward(ids, last_hidden, encoder_outputs, kp):
    B = ids.shape[0]
    T = encoder_outputs.shape[0]
    H, V = kp["H"], kp["V"]
    H_pad, V_pad = kp["H_pad"], kp["V_pad"]
    B_pad = round_up(max(B, 8), 8)

    # Embedding gather in the wrapper (ids clipped so no OOB reads anywhere).
    ids_c = jnp.clip(ids.astype(jnp.int32), 0, V - 1)
    emb_p = jnp.pad(kp["embed"][ids_c], ((0, B_pad - B), (0, 0)))      # (B_pad, E_pad)
    h0_p = jnp.pad(last_hidden[-1], ((0, B_pad - B), (0, H_pad - H)))
    enc_p = jnp.pad(encoder_outputs, ((0, 0), (0, B_pad - B), (0, H_pad - H)))

    kernel = functools.partial(decoder_kernel, b_real=B, v_real=V, h_pad=H_pad)
    vmem = pl.BlockSpec(memory_space=pltpu.MemorySpace.VMEM)

    args = (emb_p, h0_p, enc_p,
            kp["awh"], kp["awe"], kp["ab"], kp["v"],
            kp["wih"], kp["whh"], kp["bih"], kp["bhh"],
            kp["wout"], kp["ob"])

    out_shape = (jax.ShapeDtypeStruct((B_pad, V_pad), jnp.float32),
                 jax.ShapeDtypeStruct((B_pad, H_pad), jnp.float32),
                 jax.ShapeDtypeStruct((T, B_pad), jnp.float32))

    logp_p, hnew_p, attn_p = pl.pallas_call(
        kernel,
        out_shape=out_shape,
        in_specs=[vmem] * len(args),
        out_specs=(vmem, vmem, vmem),
        compiler_params=pltpu.CompilerParams(vmem_limit_bytes=32 * 1024 * 1024),
    )(*args)

    log_probs = logp_p[:B, :V]                                     # (B, V)
    new_hidden = hnew_p[:B, :H][None]                              # (1, B, H)
    attn_weights = jnp.transpose(attn_p[:, :B], (1, 0))[:, None, :]   # (B, 1, T)
    return log_probs, new_hidden, attn_weights


# ----------------------------------------------------------------------------
# Parameters (PyTorch layouts) and kernel-friendly padded/fused layouts.
# ----------------------------------------------------------------------------
def make_params(key, embed_size, hidden_size, output_size):
    E, H, V = embed_size, hidden_size, output_size
    ks = jax.random.split(key, 10)
    u = lambda k, shape, s: jax.random.uniform(k, shape, jnp.float32, -s, s)
    return {
        "embed":  u(ks[0], (V, E), 1.0),
        "attn_W": u(ks[1], (H, 2 * H), 1.0 / math.sqrt(2 * H)),
        "attn_b": u(ks[2], (H,), 1.0 / math.sqrt(2 * H)),
        "v":      u(ks[3], (H,), 1.0 / math.sqrt(H)),
        "W_ih":   u(ks[4], (3 * H, H + E), 1.0 / math.sqrt(H)),
        "W_hh":   u(ks[5], (3 * H, H), 1.0 / math.sqrt(H)),
        "b_ih":   u(ks[6], (3 * H,), 1.0 / math.sqrt(H)),
        "b_hh":   u(ks[7], (3 * H,), 1.0 / math.sqrt(H)),
        "out_W":  u(ks[8], (V, 2 * H), 1.0 / math.sqrt(2 * H)),
        "out_b":  u(ks[9], (V,), 1.0 / math.sqrt(2 * H)),
    }


def prepare_kernel_params(p, embed_size, hidden_size, output_size):
    E, H, V = embed_size, hidden_size, output_size
    E_pad, H_pad, V_pad = round_up(E, 128), round_up(H, 128), round_up(V, 128)

    def pad2(x, rows, cols):
        return jnp.pad(x, ((0, rows - x.shape[0]), (0, cols - x.shape[1])))

    # Fused GRU weights: gates (r, z, n) stacked along the output/lane axis,
    # pre-transposed and zero-padded so every gate sits at a 128-aligned slice.
    # rnn_input = [embedded (E), context (H)]; rows [0:E] -> embedded part,
    # rows [E_pad:E_pad+H] -> context part.
    wih = jnp.zeros((E_pad + H_pad, 3 * H_pad), jnp.float32)
    whh = jnp.zeros((H_pad, 3 * H_pad), jnp.float32)
    bih = jnp.zeros((1, 3 * H_pad), jnp.float32)
    bhh = jnp.zeros((1, 3 * H_pad), jnp.float32)
    for g in range(3):
        c0 = g * H_pad
        wih = wih.at[:E, c0:c0 + H].set(p["W_ih"][g * H:(g + 1) * H, :E].T)
        wih = wih.at[E_pad:E_pad + H, c0:c0 + H].set(p["W_ih"][g * H:(g + 1) * H, E:].T)
        whh = whh.at[:H, c0:c0 + H].set(p["W_hh"][g * H:(g + 1) * H, :].T)
        bih = bih.at[0, c0:c0 + H].set(p["b_ih"][g * H:(g + 1) * H])
        bhh = bhh.at[0, c0:c0 + H].set(p["b_hh"][g * H:(g + 1) * H])

    # Fused output projection: [h_new (H) | context (H)] -> V, pre-transposed.
    wout = jnp.zeros((2 * H_pad, V_pad), jnp.float32)
    wout = wout.at[:H, :V].set(p["out_W"][:, :H].T)
    wout = wout.at[H_pad:H_pad + H, :V].set(p["out_W"][:, H:].T)

    return {
        "E": E, "H": H, "V": V,
        "E_pad": E_pad, "H_pad": H_pad, "V_pad": V_pad,
        "embed": jnp.pad(p["embed"], ((0, 0), (0, E_pad - E))),    # (V, E_pad), gathered in wrapper
        "awh":   pad2(p["attn_W"][:, :H].T, H_pad, H_pad),         # hidden part of attn Linear
        "awe":   pad2(p["attn_W"][:, H:].T, H_pad, H_pad),         # encoder part of attn Linear
        "ab":    pad2(p["attn_b"].reshape(1, H), 1, H_pad),
        "v":     pad2(p["v"].reshape(1, H), 1, H_pad),             # row vector for lane reduce
        "wih": wih, "whh": whh, "bih": bih, "bhh": bhh,
        "wout": wout,
        "ob":    pad2(p["out_b"].reshape(1, V), 1, V_pad),
    }


# ----------------------------------------------------------------------------
# Pure-JAX reference mirroring the PyTorch forward exactly.
# ----------------------------------------------------------------------------
def decoder_ref(ids, h0, enc, p):
    B = ids.shape[0]
    T, _, H = enc.shape
    embedded = p["embed"][ids]                                     # (B, E)
    h_last = h0[-1]                                                # (B, H)
    enc_bt = jnp.transpose(enc, (1, 0, 2))                         # (B, T, H)
    h_rep = jnp.broadcast_to(h_last[:, None, :], (B, T, H))
    cat = jnp.concatenate([h_rep, enc_bt], axis=2)                 # (B, T, 2H)
    energy = cat @ p["attn_W"].T + p["attn_b"]                     # (B, T, H)
    energy = jax.nn.softmax(energy, axis=0)                        # legacy dim=0 softmax
    attn_e = jnp.einsum("h,bth->bt", p["v"], energy)
    attn_w = jax.nn.relu(attn_e)                                   # (B, T)
    context = jnp.einsum("bt,bth->bh", attn_w, enc_bt)             # (B, H)
    x = jnp.concatenate([embedded, context], axis=1)
    gi = x @ p["W_ih"].T + p["b_ih"]
    gh = h_last @ p["W_hh"].T + p["b_hh"]
    r = jax.nn.sigmoid(gi[:, :H] + gh[:, :H])
    z = jax.nn.sigmoid(gi[:, H:2 * H] + gh[:, H:2 * H])
    n = jnp.tanh(gi[:, 2 * H:] + r * gh[:, 2 * H:])
    h_new = (1.0 - z) * n + z * h_last
    logits = jnp.concatenate([h_new, context], axis=1) @ p["out_W"].T + p["out_b"]
    logp = jax.nn.log_softmax(logits, axis=1)
    return logp, h_new[None], attn_w[:, None, :]


if __name__ == "__main__":
    # Small shapes consistent with the module.
    B, T = 2, 8            # batch, encoder sequence length
    E, H, V = 16, 32, 40   # embed_size, hidden_size, output_size (vocab)

    key = jax.random.PRNGKey(0)
    k_ids, k_h, k_enc, k_par = jax.random.split(key, 4)

    ids = jax.random.randint(k_ids, (B,), 0, V, dtype=jnp.int32)
    last_hidden = jax.random.normal(k_h, (1, B, H), dtype=jnp.float32)
    encoder_outputs = jax.random.normal(k_enc, (T, B, H), dtype=jnp.float32)

    params_pt = make_params(k_par, E, H, V)
    params_kern = prepare_kernel_params(params_pt, E, H, V)

    logp, h_new, attn_w = decoder_forward(ids, last_hidden, encoder_outputs, params_kern)
    jax.block_until_ready((logp, h_new, attn_w))

    # Cross-check against the pure-JAX reference.
    logp_r, h_r, aw_r = decoder_ref(ids, last_hidden, encoder_outputs, params_pt)
    assert logp.shape == (B, V) and h_new.shape == (1, B, H) and attn_w.shape == (B, 1, T)
    assert jnp.allclose(logp, logp_r, atol=1e-4, rtol=1e-4)
    assert jnp.allclose(h_new, h_r, atol=1e-4, rtol=1e-4)
    assert jnp.allclose(attn_w, aw_r, atol=1e-4, rtol=1e-4)

    print("KERNEL_OK")
</pallas_src>

<mosaic_0001>
module attributes {stable_mosaic.version = 11 : i64} {
  func.func @decoder_kernel(%arg0: memref<8x128xf32, #tpu.memory_space<vmem>>, %arg1: memref<8x128xf32, #tpu.memory_space<vmem>>, %arg2: memref<8x8x128xf32, #tpu.memory_space<vmem>>, %arg3: memref<128x128xf32, #tpu.memory_space<vmem>>, %arg4: memref<128x128xf32, #tpu.memory_space<vmem>>, %arg5: memref<1x128xf32, #tpu.memory_space<vmem>>, %arg6: memref<1x128xf32, #tpu.memory_space<vmem>>, %arg7: memref<256x384xf32, #tpu.memory_space<vmem>>, %arg8: memref<128x384xf32, #tpu.memory_space<vmem>>, %arg9: memref<1x384xf32, #tpu.memory_space<vmem>>, %arg10: memref<1x384xf32, #tpu.memory_space<vmem>>, %arg11: memref<256x128xf32, #tpu.memory_space<vmem>>, %arg12: memref<1x128xf32, #tpu.memory_space<vmem>>, %arg13: memref<8x128xf32, #tpu.memory_space<vmem>>, %arg14: memref<8x128xf32, #tpu.memory_space<vmem>>, %arg15: memref<8x8xf32, #tpu.memory_space<vmem>>) attributes {dimension_semantics = [], scalar_prefetch = 0 : i64, scratch_operands = 0 : i64, tpu.core_type = #tpu.core_type<tc>} {
    %c0 = arith.constant 0 : index
    %c0_0 = arith.constant 0 : index
    %0 = vector.load %arg0[%c0, %c0_0] : memref<8x128xf32, #tpu.memory_space<vmem>>, vector<8x128xf32>
    %c0_1 = arith.constant 0 : index
    %c0_2 = arith.constant 0 : index
    %1 = vector.load %arg1[%c0_1, %c0_2] : memref<8x128xf32, #tpu.memory_space<vmem>>, vector<8x128xf32>
    %c0_3 = arith.constant 0 : index
    %c0_4 = arith.constant 0 : index
    %c0_5 = arith.constant 0 : index
    %2 = vector.load %arg2[%c0_3, %c0_4, %c0_5] : memref<8x8x128xf32, #tpu.memory_space<vmem>>, vector<8x8x128xf32>
    %3 = vector.shape_cast %2 : vector<8x8x128xf32> to vector<64x128xf32>
    %c0_6 = arith.constant 0 : index
    %c0_7 = arith.constant 0 : index
    %4 = vector.load %arg3[%c0_6, %c0_7] : memref<128x128xf32, #tpu.memory_space<vmem>>, vector<128x128xf32>
    %cst = arith.constant dense<0.000000e+00> : vector<8x128xf32>
    %5 = tpu.matmul %1, %4, %cst {dimension_numbers = #tpu.dot_dimension_numbers<[1], [0], [0], [1], [0, 0, 1, 1], [], []>} : vector<8x128xf32>, vector<128x128xf32>, vector<8x128xf32> -> vector<8x128xf32>
    %c0_8 = arith.constant 0 : index
    %c0_9 = arith.constant 0 : index
    %6 = vector.load %arg4[%c0_8, %c0_9] : memref<128x128xf32, #tpu.memory_space<vmem>>, vector<128x128xf32>
    %cst_10 = arith.constant dense<0.000000e+00> : vector<64x128xf32>
    %7 = tpu.matmul %3, %6, %cst_10 {dimension_numbers = #tpu.dot_dimension_numbers<[1], [0], [0], [1], [0, 0, 1, 1], [], []>} : vector<64x128xf32>, vector<128x128xf32>, vector<64x128xf32> -> vector<64x128xf32>
    %8 = vector.shape_cast %7 : vector<64x128xf32> to vector<8x8x128xf32>
    %9 = vector.shape_cast %5 : vector<8x128xf32> to vector<1x8x128xf32>
    %10 = vector.broadcast %9 : vector<1x8x128xf32> to vector<8x8x128xf32>
    %11 = arith.addf %8, %10 : vector<8x8x128xf32>
    %c0_11 = arith.constant 0 : index
    %c0_12 = arith.constant 0 : index
    %12 = vector.load %arg5[%c0_11, %c0_12] : memref<1x128xf32, #tpu.memory_space<vmem>>, vector<1x128xf32>
    %13 = vector.shape_cast %12 : vector<1x128xf32> to vector<1x1x128xf32>
    %14 = vector.broadcast %13 : vector<1x1x128xf32> to vector<8x8x128xf32>
    %15 = arith.addf %11, %14 : vector<8x8x128xf32>
    %16 = tpu.iota {dimensions = array<i32: 0>} : vector<8x1xi32>
    %c2_i32 = arith.constant 2 : i32
    %17 = vector.broadcast %c2_i32 : i32 to vector<8x1xi32>
    %18 = arith.cmpi slt, %16, %17 : vector<8x1xi32>
    %cst_13 = arith.constant -1.000000e+30 : f32
    %19 = vector.shape_cast %18 : vector<8x1xi1> to vector<1x8x1xi1>
    %20 = vector.broadcast %19 : vector<1x8x1xi1> to vector<8x8x128xi1>
    %21 = vector.broadcast %cst_13 : f32 to vector<8x8x128xf32>
    %22 = arith.select %20, %15, %21 : vector<8x8x128xi1>, vector<8x8x128xf32>
    %cst_14 = arith.constant dense<0xFF800000> : vector<8x128xf32>
    %23 = vector.multi_reduction <maximumf>, %22, %cst_14 [1] : vector<8x8x128xf32> to vector<8x128xf32>
    %24 = vector.shape_cast %23 : vector<8x128xf32> to vector<8x1x128xf32>
    %25 = vector.broadcast %24 : vector<8x1x128xf32> to vector<8x8x128xf32>
    %26 = arith.subf %22, %25 : vector<8x8x128xf32>
    %27 = math.exp %26 : vector<8x8x128xf32>
    %cst_15 = arith.constant dense<0.000000e+00> : vector<8x128xf32>
    %28 = vector.multi_reduction <add>, %27, %cst_15 [1] : vector<8x8x128xf32> to vector<8x128xf32>
    %29 = vector.shape_cast %28 : vector<8x128xf32> to vector<8x1x128xf32>
    %cst_16 = arith.constant 1.000000e+00 : f32
    %30 = vector.broadcast %cst_16 : f32 to vector<8x1x128xf32>
    %31 = arith.divf %30, %29 : vector<8x1x128xf32>
    %32 = vector.broadcast %31 : vector<8x1x128xf32> to vector<8x8x128xf32>
    %33 = arith.mulf %27, %32 : vector<8x8x128xf32>
    %c0_17 = arith.constant 0 : index
    %c0_18 = arith.constant 0 : index
    %34 = vector.load %arg6[%c0_17, %c0_18] : memref<1x128xf32, #tpu.memory_space<vmem>>, vector<1x128xf32>
    %35 = vector.shape_cast %34 : vector<1x128xf32> to vector<1x1x128xf32>
    %36 = vector.broadcast %35 : vector<1x1x128xf32> to vector<8x8x128xf32>
    %37 = arith.mulf %33, %36 : vector<8x8x128xf32>
    %cst_19 = arith.constant dense<0.000000e+00> : vector<8x8xf32>
    %38 = vector.multi_reduction <add>, %37, %cst_19 [2] : vector<8x8x128xf32> to vector<8x8xf32>
    %39 = vector.shape_cast %38 : vector<8x8xf32> to vector<8x8x1xf32>
    %cst_20 = arith.constant 0.000000e+00 : f32
    %40 = vector.broadcast %cst_20 : f32 to vector<8x8x1xf32>
    %41 = arith.maximumf %39, %40 : vector<8x8x1xf32>
    %cst_21 = arith.constant dense<0.000000e+00> : vector<8x8xf32>
    %42 = vector.multi_reduction <add>, %37, %cst_21 [2] : vector<8x8x128xf32> to vector<8x8xf32>
    %cst_22 = arith.constant 0.000000e+00 : f32
    %43 = vector.broadcast %cst_22 : f32 to vector<8x8xf32>
    %44 = arith.maximumf %42, %43 : vector<8x8xf32>
    %c0_23 = arith.constant 0 : index
    %c0_24 = arith.constant 0 : index
    %45 = vector.load %arg15[%c0_23, %c0_24] : memref<8x8xf32, #tpu.memory_space<vmem>>, vector<8x8xf32>
    tpu.vector_store %arg15[%c0_23, %c0_24], %44 {strides = array<i32>} : memref<8x8xf32, #tpu.memory_space<vmem>>, vector<8x8xf32>,
    %46 = vector.broadcast %41 : vector<8x8x1xf32> to vector<8x8x128xf32>
    %47 = arith.mulf %46, %2 : vector<8x8x128xf32>
    %cst_25 = arith.constant dense<0.000000e+00> : vector<8x128xf32>
    %48 = vector.multi_reduction <add>, %47, %cst_25 [0] : vector<8x8x128xf32> to vector<8x128xf32>
    %49 = tpu.concatenate %0, %48 in 1 : vector<8x128xf32>, vector<8x128xf32> -> vector<8x256xf32>
    %c0_26 = arith.constant 0 : index
    %c0_27 = arith.constant 0 : index
    %50 = vector.load %arg7[%c0_26, %c0_27] : memref<256x384xf32, #tpu.memory_space<vmem>>, vector<256x384xf32>
    %cst_28 = arith.constant dense<0.000000e+00> : vector<8x384xf32>
    %51 = tpu.matmul %49, %50, %cst_28 {dimension_numbers = #tpu.dot_dimension_numbers<[1], [0], [0], [1], [0, 0, 1, 1], [], []>} : vector<8x256xf32>, vector<256x384xf32>, vector<8x384xf32> -> vector<8x384xf32>
    %c0_29 = arith.constant 0 : index
    %c0_30 = arith.constant 0 : index
    %52 = vector.load %arg9[%c0_29, %c0_30] : memref<1x384xf32, #tpu.memory_space<vmem>>, vector<1x384xf32>
    %53 = vector.broadcast %52 : vector<1x384xf32> to vector<8x384xf32>
    %54 = arith.addf %51, %53 : vector<8x384xf32>
    %c0_31 = arith.constant 0 : index
    %c0_32 = arith.constant 0 : index
    %55 = vector.load %arg8[%c0_31, %c0_32] : memref<128x384xf32, #tpu.memory_space<vmem>>, vector<128x384xf32>
    %cst_33 = arith.constant dense<0.000000e+00> : vector<8x384xf32>
    %56 = tpu.matmul %1, %55, %cst_33 {dimension_numbers = #tpu.dot_dimension_numbers<[1], [0], [0], [1], [0, 0, 1, 1], [], []>} : vector<8x128xf32>, vector<128x384xf32>, vector<8x384xf32> -> vector<8x384xf32>
    %c0_34 = arith.constant 0 : index
    %c0_35 = arith.constant 0 : index
    %57 = vector.load %arg10[%c0_34, %c0_35] : memref<1x384xf32, #tpu.memory_space<vmem>>, vector<1x384xf32>
    %58 = vector.broadcast %57 : vector<1x384xf32> to vector<8x384xf32>
    %59 = arith.addf %56, %58 : vector<8x384xf32>
    %60 = vector.extract_strided_slice %54 {offsets = [0, 0], sizes = [8, 128], strides = [1, 1]} : vector<8x384xf32> to vector<8x128xf32>
    %61 = vector.extract_strided_slice %59 {offsets = [0, 0], sizes = [8, 128], strides = [1, 1]} : vector<8x384xf32> to vector<8x128xf32>
    %62 = arith.addf %60, %61 : vector<8x128xf32>
    %63 = arith.negf %62 : vector<8x128xf32>
    %64 = math.exp %63 : vector<8x128xf32>
    %cst_36 = arith.constant 1.000000e+00 : f32
    %65 = vector.broadcast %cst_36 : f32 to vector<8x128xf32>
    %66 = arith.addf %65, %64 : vector<8x128xf32>
    %67 = arith.divf %65, %66 : vector<8x128xf32>
    %68 = vector.extract_strided_slice %54 {offsets = [0, 128], sizes = [8, 128], strides = [1, 1]} : vector<8x384xf32> to vector<8x128xf32>
    %69 = vector.extract_strided_slice %59 {offsets = [0, 128], sizes = [8, 128], strides = [1, 1]} : vector<8x384xf32> to vector<8x128xf32>
    %70 = arith.addf %68, %69 : vector<8x128xf32>
    %71 = arith.negf %70 : vector<8x128xf32>
    %72 = math.exp %71 : vector<8x128xf32>
    %cst_37 = arith.constant 1.000000e+00 : f32
    %73 = vector.broadcast %cst_37 : f32 to vector<8x128xf32>
    %74 = arith.addf %73, %72 : vector<8x128xf32>
    %75 = arith.divf %73, %74 : vector<8x128xf32>
    %76 = vector.extract_strided_slice %54 {offsets = [0, 256], sizes = [8, 128], strides = [1, 1]} : vector<8x384xf32> to vector<8x128xf32>
    %77 = vector.extract_strided_slice %59 {offsets = [0, 256], sizes = [8, 128], strides = [1, 1]} : vector<8x384xf32> to vector<8x128xf32>
    %78 = arith.mulf %67, %77 : vector<8x128xf32>
    %79 = arith.addf %76, %78 : vector<8x128xf32>
    %80 = math.tanh %79 : vector<8x128xf32>
    %cst_38 = arith.constant 1.000000e+00 : f32
    %81 = vector.broadcast %cst_38 : f32 to vector<8x128xf32>
    %82 = arith.subf %81, %75 : vector<8x128xf32>
    %83 = arith.mulf %82, %80 : vector<8x128xf32>
    %84 = arith.mulf %75, %1 : vector<8x128xf32>
    %85 = arith.addf %83, %84 : vector<8x128xf32>
    %c0_39 = arith.constant 0 : index
    %c0_40 = arith.constant 0 : index
    %86 = vector.load %arg14[%c0_39, %c0_40] : memref<8x128xf32, #tpu.memory_space<vmem>>, vector<8x128xf32>
    tpu.vector_store %arg14[%c0_39, %c0_40], %85 {strides = array<i32>} : memref<8x128xf32, #tpu.memory_space<vmem>>, vector<8x128xf32>,
    %87 = tpu.concatenate %85, %48 in 1 : vector<8x128xf32>, vector<8x128xf32> -> vector<8x256xf32>
    %c0_41 = arith.constant 0 : index
    %c0_42 = arith.constant 0 : index
    %88 = vector.load %arg11[%c0_41, %c0_42] : memref<256x128xf32, #tpu.memory_space<vmem>>, vector<256x128xf32>
    %cst_43 = arith.constant dense<0.000000e+00> : vector<8x128xf32>
    %89 = tpu.matmul %87, %88, %cst_43 {dimension_numbers = #tpu.dot_dimension_numbers<[1], [0], [0], [1], [0, 0, 1, 1], [], []>} : vector<8x256xf32>, vector<256x128xf32>, vector<8x128xf32> -> vector<8x128xf32>
    %c0_44 = arith.constant 0 : index
    %c0_45 = arith.constant 0 : index
    %90 = vector.load %arg12[%c0_44, %c0_45] : memref<1x128xf32, #tpu.memory_space<vmem>>, vector<1x128xf32>
    %91 = vector.broadcast %90 : vector<1x128xf32> to vector<8x128xf32>
    %92 = arith.addf %89, %91 : vector<8x128xf32>
    %93 = tpu.iota {dimensions = array<i32: 1>} : vector<1x128xi32>
    %c40_i32 = arith.constant 40 : i32
    %94 = vector.broadcast %c40_i32 : i32 to vector<1x128xi32>
    %95 = arith.cmpi slt, %93, %94 : vector<1x128xi32>
    %cst_46 = arith.constant -1.000000e+30 : f32
    %96 = vector.shape_cast %95 : vector<1x128xi1> to vector<1x128xi1>
    %97 = vector.broadcast %96 : vector<1x128xi1> to vector<8x128xi1>
    %98 = vector.broadcast %cst_46 : f32 to vector<8x128xf32>
    %99 = arith.select %97, %92, %98 : vector<8x128xi1>, vector<8x128xf32>
    %cst_47 = arith.constant dense<0xFF800000> : vector<8xf32>
    %100 = vector.multi_reduction <maximumf>, %99, %cst_47 [1] : vector<8x128xf32> to vector<8xf32>
    %101 = vector.shape_cast %100 : vector<8xf32> to vector<8x1xf32>
    %102 = vector.broadcast %101 : vector<8x1xf32> to vector<8x128xf32>
    %103 = arith.subf %99, %102 : vector<8x128xf32>
    %104 = math.exp %103 : vector<8x128xf32>
    %cst_48 = arith.constant dense<0.000000e+00> : vector<8xf32>
    %105 = vector.multi_reduction <add>, %104, %cst_48 [1] : vector<8x128xf32> to vector<8xf32>
    %106 = vector.shape_cast %105 : vector<8xf32> to vector<8x1xf32>
    %107 = math.log %106 : vector<8x1xf32>
    %108 = vector.broadcast %107 : vector<8x1xf32> to vector<8x128xf32>
    %109 = arith.subf %103, %108 : vector<8x128xf32>
    %c0_49 = arith.constant 0 : index
    %c0_50 = arith.constant 0 : index
    %110 = vector.load %arg13[%c0_49, %c0_50] : memref<8x128xf32, #tpu.memory_space<vmem>>, vector<8x128xf32>
    tpu.vector_store %arg13[%c0_49, %c0_50], %109 {strides = array<i32>} : memref<8x128xf32, #tpu.memory_space<vmem>>, vector<8x128xf32>,
    return
  }
}

</mosaic_0001>

<llo_original>
// kernel: tpu_custom_call.1
$region0: #{tpu_custom_call.1}
  #allocation0 [shape = 'u32[]', space=smem, size = 0x4, offset = 0x4, fixed_abs, tag = 'smem constant byte address 0x4 - core index']
  #allocation1 [shape = 'u32[144,128]{1,0:T(1,128)}', space=vmem, size = 0x12000, scoped, tag = 'internal scratch']
  %s0 = inlined_call_operand.hbm [shape: f32[8,128], index: 0, kind: input, shape index: {}]
  %s1 = inlined_call_operand.hbm [shape: f32[8,128], index: 1, kind: input, shape index: {}]
  %s2 = inlined_call_operand.hbm [shape: f32[8,8,128], index: 2, kind: input, shape index: {}]
  %s3 = inlined_call_operand.hbm [shape: f32[128,128], index: 3, kind: input, shape index: {}]
  %s4 = inlined_call_operand.hbm [shape: f32[128,128], index: 4, kind: input, shape index: {}]
  %s5 = inlined_call_operand.vmem [shape: f32[1,128], index: 5, kind: input, shape index: {}]
  %s6 = inlined_call_operand.vmem [shape: f32[1,128], index: 6, kind: input, shape index: {}]
  %s7 = inlined_call_operand.hbm [shape: f32[256,384], index: 7, kind: input, shape index: {}]
  %s8 = inlined_call_operand.hbm [shape: f32[128,384], index: 8, kind: input, shape index: {}]
  %s9 = inlined_call_operand.vmem [shape: f32[1,384], index: 9, kind: input, shape index: {}]
  %s10 = inlined_call_operand.vmem [shape: f32[1,384], index: 10, kind: input, shape index: {}]
  %s11 = inlined_call_operand.hbm [shape: f32[256,128], index: 11, kind: input, shape index: {}]
  %s12 = inlined_call_operand.vmem [shape: f32[1,128], index: 12, kind: input, shape index: {}]
  %s13 = inlined_call_operand.hbm [shape: f32[8,128], index: 13, kind: output, shape index: {0}]
  %s14 = inlined_call_operand.hbm [shape: f32[8,128], index: 14, kind: output, shape index: {1}]
  %s15 = inlined_call_operand.hbm [shape: f32[8,8], index: 15, kind: output, shape index: {2}]
  %16 = xla_tuple %s13, %s14, %s15
  %s17 = sld [smem:[#allocation0]]
  $region110: #{tpu_custom_call.1} parent=0
    _
  %s19 = ssub.s32 1, %s17
  %s20 = scalar_select 0, %s19, %s17
  $region1: #{tpu_custom_call.1} parent=0
    #allocation2 [shape = 'u8[4096]{0}', space=vmem, size = 0x1000, scoped, tag = 'input window, operand 0, single buffered']
    #allocation3 [shape = 's32[1]{0}', space=sflag, size = 0x4, scoped, tag = 'scoped memory for tpu_custom_call.1']
    #allocation4 [shape = 's32[1]{0}', space=sflag, size = 0x4, scoped, tag = 'scoped memory for tpu_custom_call.1']
    #allocation5 [shape = 'u8[4096]{0}', space=vmem, size = 0x1000, scoped, tag = 'input window, operand 1, single buffered']
    #allocation6 [shape = 's32[1]{0}', space=sflag, size = 0x4, scoped, tag = 'scoped memory for tpu_custom_call.1']
    #allocation7 [shape = 'u8[32768]{0}', space=vmem, size = 0x8000, scoped, tag = 'input window, operand 2, single buffered']
    #allocation8 [shape = 'u8[65536]{0}', space=vmem, size = 0x10000, scoped, tag = 'input window, operand 3, single buffered']
    #allocation9 [shape = 's32[1]{0}', space=sflag, size = 0x4, scoped, tag = 'scoped memory for tpu_custom_call.1']
    #allocation10 [shape = 'u8[65536]{0}', space=vmem, size = 0x10000, scoped, tag = 'input window, operand 4, single buffered']
    #allocation11 [shape = 'u8[393216]{0}', space=vmem, size = 0x60000, scoped, tag = 'input window, operand 7, single buffered']
    #allocation12 [shape = 's32[1]{0}', space=sflag, size = 0x4, scoped, tag = 'scoped memory for tpu_custom_call.1']
    #allocation13 [shape = 'u8[196608]{0}', space=vmem, size = 0x30000, scoped, tag = 'input window, operand 8, single buffered']
    #allocation14 [shape = 'u8[131072]{0}', space=vmem, size = 0x20000, scoped, tag = 'input window, operand 11, single buffered']
    #allocation15 [shape = 's32[1]{0}', space=sflag, size = 0x4, scoped, tag = 'scoped memory for tpu_custom_call.1']
    #allocation16 [shape = 'u8[4096]{0}', space=vmem, size = 0x1000, scoped, tag = 'output window, operand 0, single buffered']
    #allocation17 [shape = 'u8[4096]{0}', space=vmem, size = 0x1000, scoped, tag = 'output window, operand 1, single buffered']
    #allocation18 [shape = 's32[1]{0}', space=sflag, size = 0x4, scoped, tag = 'scoped memory for tpu_custom_call.1']
    #allocation19 [shape = 'u8[4096]{0}', space=vmem, size = 0x1000, scoped, tag = 'output window, operand 2, single buffered']
    %21 = vsyncpa [#allocation3], 0
    %22 = vsyncpa [#allocation6], 0
    %23 = vsyncpa [#allocation9], 0
    %24 = vsyncpa [#allocation12], 0
    %25 = vsyncpa [#allocation15], 0
    %26 = vsyncpa [#allocation4], 0
    %27 = vsyncpa [#allocation18], 0
    // Predicated region
    $region2: #{tpu_custom_call.1} parent=1 // pred_check
      _
    $region3: #{tpu_custom_call.1} parent=1 // pred_check_branch
      %29 = sbr.rel (0) target = $region5
    $region4: #{tpu_custom_call.1} parent=1 // pred_region
      %s31 = ssub.s32 128, 128
      %32 = vsyncadd [#allocation3], %s31
      %s34 = sshll.u32 [#allocation2], 4
      %s35 = int_to_ptr.vmem [resolvable:$true] %s34
      %37 = dma.hbm_to_vmem [thread:$0]  %s0, 128, %s35, [#allocation3]
    $region5: #{tpu_custom_call.1} parent=1 // pred_fallthru
      _
    // Predicated region
    $region6: #{tpu_custom_call.1} parent=1 // pred_check
      _
    $region7: #{tpu_custom_call.1} parent=1 // pred_check_branch
      %39 = sbr.rel (0) target = $region9
    $region8: #{tpu_custom_call.1} parent=1 // pred_region
      %s41 = ssub.s32 128, 128
      %42 = vsyncadd [#allocation6], %s41
      %s44 = sshll.u32 [#allocation5], 4
      %s45 = int_to_ptr.vmem [resolvable:$true] %s44
      %47 = dma.hbm_to_vmem [thread:$0]  %s1, 128, %s45, [#allocation6]
    $region9: #{tpu_custom_call.1} parent=1 // pred_fallthru
      _
    // Predicated region
    $region10: #{tpu_custom_call.1} parent=1 // pred_check
      _
    $region11: #{tpu_custom_call.1} parent=1 // pred_check_branch
      %49 = sbr.rel (0) target = $region13
    $region12: #{tpu_custom_call.1} parent=1 // pred_region
      %s51 = ssub.s32 1024, 1024
      %52 = vsyncadd [#allocation6], %s51
      %s53 = sshll.u32 [#allocation7], 4
      %s54 = int_to_ptr.vmem [resolvable:$true] %s53
      %59 = dma.hbm_to_vmem [thread:$0]  %s2, 1024, %s54, [#allocation6], 128, 128, 8
    $region13: #{tpu_custom_call.1} parent=1 // pred_fallthru
      _
    // Predicated region
    $region14: #{tpu_custom_call.1} parent=1 // pred_check
      _
    $region15: #{tpu_custom_call.1} parent=1 // pred_check_branch
      %61 = sbr.rel (0) target = $region17
    $region16: #{tpu_custom_call.1} parent=1 // pred_region
      %s63 = ssub.s32 2048, 2048
      %64 = vsyncadd [#allocation9], %s63
      %s65 = sshll.u32 [#allocation8], 4
      %s66 = int_to_ptr.vmem [resolvable:$true] %s65
      %71 = dma.hbm_to_vmem [thread:$0]  %s3, 2048, %s66, [#allocation9], 128, 128, 8
    $region17: #{tpu_custom_call.1} parent=1 // pred_fallthru
      _
    // Predicated region
    $region18: #{tpu_custom_call.1} parent=1 // pred_check
      _
    $region19: #{tpu_custom_call.1} parent=1 // pred_check_branch
      %73 = sbr.rel (0) target = $region21
    $region20: #{tpu_custom_call.1} parent=1 // pred_region
      %s75 = ssub.s32 2048, 2048
      %76 = vsyncadd [#allocation9], %s75
      %s77 = sshll.u32 [#allocation10], 4
      %s78 = int_to_ptr.vmem [resolvable:$true] %s77
      %83 = dma.hbm_to_vmem [thread:$0]  %s4, 2048, %s78, [#allocation9], 128, 128, 8
    $region21: #{tpu_custom_call.1} parent=1 // pred_fallthru
      _
    // Predicated region
    $region22: #{tpu_custom_call.1} parent=1 // pred_check
      _
    $region23: #{tpu_custom_call.1} parent=1 // pred_check_branch
      %85 = sbr.rel (0) target = $region25
    $region24: #{tpu_custom_call.1} parent=1 // pred_region
      _
    $region25: #{tpu_custom_call.1} parent=1 // pred_fallthru
      _
    // Predicated region
    $region26: #{tpu_custom_call.1} parent=1 // pred_check
      _
    $region27: #{tpu_custom_call.1} parent=1 // pred_check_branch
      %87 = sbr.rel (0) target = $region29
    $region28: #{tpu_custom_call.1} parent=1 // pred_region
      _
    $region29: #{tpu_custom_call.1} parent=1 // pred_fallthru
      _
    // Predicated region
    $region30: #{tpu_custom_call.1} parent=1 // pred_check
      _
    $region31: #{tpu_custom_call.1} parent=1 // pred_check_branch
      %89 = sbr.rel (0) target = $region33
    $region32: #{tpu_custom_call.1} parent=1 // pred_region
      %s91 = ssub.s32 12288, 12288
      %92 = vsyncadd [#allocation12], %s91
      %s93 = sshll.u32 [#allocation11], 4
      %s94 = int_to_ptr.vmem [resolvable:$true] %s93
      %99 = dma.hbm_to_vmem [thread:$0]  %s7, 12288, %s94, [#allocation12], 384, 384, 24
    $region33: #{tpu_custom_call.1} parent=1 // pred_fallthru
      _
    // Predicated region
    $region34: #{tpu_custom_call.1} parent=1 // pred_check
      _
    $region35: #{tpu_custom_call.1} parent=1 // pred_check_branch
      %101 = sbr.rel (0) target = $region37
    $region36: #{tpu_custom_call.1} parent=1 // pred_region
      %s103 = ssub.s32 6144, 6144
      %104 = vsyncadd [#allocation12], %s103
      %s105 = sshll.u32 [#allocation13], 4
      %s106 = int_to_ptr.vmem [resolvable:$true] %s105
      %111 = dma.hbm_to_vmem [thread:$0]  %s8, 6144, %s106, [#allocation12], 384, 384, 24
    $region37: #{tpu_custom_call.1} parent=1 // pred_fallthru
      _
    // Predicated region
    $region38: #{tpu_custom_call.1} parent=1 // pred_check
      _
    $region39: #{tpu_custom_call.1} parent=1 // pred_check_branch
      %113 = sbr.rel (0) target = $region41
    $region40: #{tpu_custom_call.1} parent=1 // pred_region
      _
    $region41: #{tpu_custom_call.1} parent=1 // pred_fallthru
      _
    // Predicated region
    $region42: #{tpu_custom_call.1} parent=1 // pred_check
      _
    $region43: #{tpu_custom_call.1} parent=1 // pred_check_branch
      %115 = sbr.rel (0) target = $region45
    $region44: #{tpu_custom_call.1} parent=1 // pred_region
      _
    $region45: #{tpu_custom_call.1} parent=1 // pred_fallthru
      _
    // Predicated region
    $region46: #{tpu_custom_call.1} parent=1 // pred_check
      _
    $region47: #{tpu_custom_call.1} parent=1 // pred_check_branch
      %117 = sbr.rel (0) target = $region49
    $region48: #{tpu_custom_call.1} parent=1 // pred_region
      %s119 = ssub.s32 4096, 4096
      %120 = vsyncadd [#allocation15], %s119
      %s121 = sshll.u32 [#allocation14], 4
      %s122 = int_to_ptr.vmem [resolvable:$true] %s121
      %127 = dma.hbm_to_vmem [thread:$0]  %s11, 4096, %s122, [#allocation15], 128, 128, 8
    $region49: #{tpu_custom_call.1} parent=1 // pred_fallthru
      _
    // Predicated region
    $region50: #{tpu_custom_call.1} parent=1 // pred_check
      _
    $region51: #{tpu_custom_call.1} parent=1 // pred_check_branch
      %129 = sbr.rel (0) target = $region53
    $region52: #{tpu_custom_call.1} parent=1 // pred_region
      _
    $region53: #{tpu_custom_call.1} parent=1 // pred_fallthru
      _
    // Predicated region
    $region54: #{tpu_custom_call.1} parent=1 // pred_check
      _
    $region55: #{tpu_custom_call.1} parent=1 // pred_check_branch
      %131 = sbr.rel (0) target = $region57
    $region56: #{tpu_custom_call.1} parent=1 // pred_region
      %132 = dma.done [#allocation3], 128
    $region57: #{tpu_custom_call.1} parent=1 // pred_fallthru
      _
    // Predicated region
    $region58: #{tpu_custom_call.1} parent=1 // pred_check
      _
    $region59: #{tpu_custom_call.1} parent=1 // pred_check_branch
      %134 = sbr.rel (0) target = $region61
    $region60: #{tpu_custom_call.1} parent=1 // pred_region
      %135 = dma.done [#allocation6], 128
    $region61: #{tpu_custom_call.1} parent=1 // pred_fallthru
      _
    // Predicated region
    $region62: #{tpu_custom_call.1} parent=1 // pred_check
      _
    $region63: #{tpu_custom_call.1} parent=1 // pred_check_branch
      %137 = sbr.rel (0) target = $region65
    $region64: #{tpu_custom_call.1} parent=1 // pred_region
      %138 = dma.done [#allocation6], 1024
    $region65: #{tpu_custom_call.1} parent=1 // pred_fallthru
      _
    // Predicated region
    $region66: #{tpu_custom_call.1} parent=1 // pred_check
      _
    $region67: #{tpu_custom_call.1} parent=1 // pred_check_branch
      %140 = sbr.rel (0) target = $region69
    $region68: #{tpu_custom_call.1} parent=1 // pred_region
      %141 = dma.done [#allocation9], 2048
    $region69: #{tpu_custom_call.1} parent=1 // pred_fallthru
      _
    // Predicated region
    $region70: #{tpu_custom_call.1} parent=1 // pred_check
      _
    $region71: #{tpu_custom_call.1} parent=1 // pred_check_branch
      %143 = sbr.rel (0) target = $region73
    $region72: #{tpu_custom_call.1} parent=1 // pred_region
      %144 = dma.done [#allocation9], 2048
    $region73: #{tpu_custom_call.1} parent=1 // pred_fallthru
      _
    // Predicated region
    $region74: #{tpu_custom_call.1} parent=1 // pred_check
      _
    $region75: #{tpu_custom_call.1} parent=1 // pred_check_branch
      %146 = sbr.rel (0) target = $region77
    $region76: #{tpu_custom_call.1} parent=1 // pred_region
      %147 = dma.done [#allocation12], 12288
    $region77: #{tpu_custom_call.1} parent=1 // pred_fallthru
      _
    // Predicated region
    $region78: #{tpu_custom_call.1} parent=1 // pred_check
      _
    $region79: #{tpu_custom_call.1} parent=1 // pred_check_branch
      %149 = sbr.rel (0) target = $region81
    $region80: #{tpu_custom_call.1} parent=1 // pred_region
      %150 = dma.done [#allocation12], 6144
    $region81: #{tpu_custom_call.1} parent=1 // pred_fallthru
      _
    // Predicated region
    $region82: #{tpu_custom_call.1} parent=1 // pred_check
      _
    $region83: #{tpu_custom_call.1} parent=1 // pred_check_branch
      %152 = sbr.rel (0) target = $region85
    $region84: #{tpu_custom_call.1} parent=1 // pred_region
      %153 = dma.done [#allocation15], 4096
    $region85: #{tpu_custom_call.1} parent=1 // pred_fallthru
      _
    %v154 = vld [vmem:[#allocation2] sm:$0xff]
    %v155 = vld [vmem:[#allocation5] sm:$0xff]
    %v156 = vld [vmem:[#allocation7] sm:$0xff]
    %v157 = vld [vmem:[#allocation7 + $0x8] sm:$0xff]
    %v158 = vld [vmem:[#allocation7 + $0x10] sm:$0xff]
    %v159 = vld [vmem:[#allocation7 + $0x18] sm:$0xff]
    %v160 = vld [vmem:[#allocation7 + $0x20] sm:$0xff]
    %v161 = vld [vmem:[#allocation7 + $0x28] sm:$0xff]
    %v162 = vld [vmem:[#allocation7 + $0x30] sm:$0xff]
    %v163 = vld [vmem:[#allocation7 + $0x38] sm:$0xff]
    %v164 = vld [vmem:[#allocation8] sm:$0xff]
    %v165 = vld [vmem:[#allocation8 + $0x8] sm:$0xff]
    %v166 = vld [vmem:[#allocation8 + $0x10] sm:$0xff]
    %v167 = vld [vmem:[#allocation8 + $0x18] sm:$0xff]
    %v168 = vld [vmem:[#allocation8 + $0x20] sm:$0xff]
    %v169 = vld [vmem:[#allocation8 + $0x28] sm:$0xff]
    %v170 = vld [vmem:[#allocation8 + $0x30] sm:$0xff]
    %v171 = vld [vmem:[#allocation8 + $0x38] sm:$0xff]
    %v172 = vld [vmem:[#allocation8 + $0x40] sm:$0xff]
    %v173 = vld [vmem:[#allocation8 + $0x48] sm:$0xff]
    %v174 = vld [vmem:[#allocation8 + $0x50] sm:$0xff]
    %v175 = vld [vmem:[#allocation8 + $0x58] sm:$0xff]
    %v176 = vld [vmem:[#allocation8 + $0x60] sm:$0xff]
    %v177 = vld [vmem:[#allocation8 + $0x68] sm:$0xff]
    %v178 = vld [vmem:[#allocation8 + $0x70] sm:$0xff]
    %v179 = vld [vmem:[#allocation8 + $0x78] sm:$0xff]
    %180 = vmatprep.subr.mxu0 0.0
    %181 = vmatpush1.msra.mxu0 %v164
    %182 = vmatprep.subr.mxu0 0.0
    %183 = vmatpush1.msra.mxu0 %v165
    %184 = vmatprep.subr.mxu0 0.0
    %185 = vmatpush1.msra.mxu0 %v166
    %186 = vmatprep.subr.mxu0 0.0
    %187 = vmatpush1.msra.mxu0 %v167
    %188 = vmatprep.subr.mxu0 0.0
    %189 = vmatpush1.msra.mxu0 %v168
    %190 = vmatprep.subr.mxu0 0.0
    %191 = vmatpush1.msra.mxu0 %v169
    %192 = vmatprep.subr.mxu0 0.0
    %193 = vmatpush1.msra.mxu0 %v170
    %194 = vmatprep.subr.mxu0 0.0
    %195 = vmatpush1.msra.mxu0 %v171
    %196 = vmatprep.subr.mxu0 0.0
    %197 = vmatpush1.msra.mxu0 %v172
    %198 = vmatprep.subr.mxu0 0.0
    %199 = vmatpush1.msra.mxu0 %v173
    %200 = vmatprep.subr.mxu0 0.0
    %201 = vmatpush1.msra.mxu0 %v174
    %202 = vmatprep.subr.mxu0 0.0
    %203 = vmatpush1.msra.mxu0 %v175
    %204 = vmatprep.subr.mxu0 0.0
    %205 = vmatpush1.msra.mxu0 %v176
    %206 = vmatprep.subr.mxu0 0.0
    %207 = vmatpush1.msra.mxu0 %v177
    %208 = vmatprep.subr.mxu0 0.0
    %209 = vmatpush1.msra.mxu0 %v178
    %210 = vmatprep.subr.mxu0 0.0
    %211 = vmatpush1.msra.mxu0 %v179
    %212 = vmatprep.subr.mxu0 0.0
    %213 = vmatpush1.msra.mxu0 0.0
    %214 = vmatprep.subr.mxu0 0.0
    %215 = vmatpush1.msra.mxu0 0.0
    %216 = vmatprep.subr.mxu0 0.0
    %217 = vmatpush1.msra.mxu0 0.0
    %218 = vmatprep.subr.mxu0 0.0
    %219 = vmatpush1.msra.mxu0 0.0
    %220 = vmatprep.subr.mxu0 0.0
    %221 = vmatpush1.msra.mxu0 0.0
    %222 = vmatprep.subr.mxu0 0.0
    %223 = vmatpush1.msra.mxu0 0.0
    %224 = vmatprep.subr.mxu0 0.0
    %225 = vmatpush1.msra.mxu0 0.0
    %226 = vmatprep.subr.mxu0 0.0
    %227 = vmatpush1.msra.mxu0 0.0
    %228 = vmatprep.subr.mxu0 0.0
    %229 = vmatpush1.msra.mxu0 0.0
    %230 = vmatprep.subr.mxu0 0.0
    %231 = vmatpush1.msra.mxu0 0.0
    %232 = vmatprep.subr.mxu0 0.0
    %233 = vmatpush1.msra.mxu0 0.0
    %234 = vmatprep.subr.mxu0 0.0
    %235 = vmatpush1.msra.mxu0 0.0
    %236 = vmatprep.subr.mxu0 0.0
    %237 = vmatpush1.msra.mxu0 0.0
    %238 = vmatprep.subr.mxu0 0.0
    %239 = vmatpush1.msra.mxu0 0.0
    %240 = vmatprep.subr.mxu0 0.0
    %241 = vmatpush1.msra.mxu0 0.0
    %242 = vmatprep.subr.mxu0 0.0
    %243 = vmatpush1.msra.mxu0 0.0
    %244 = vmatprep.mubr.f32.mxu0 0.0
    %245 = vmatmul.mubr.f32.gmra.mrb[0].mxu0 %v155
    %v246 = vpop.f32.mrb[0].mxu0
    %v247 = vadd.f32 0.0, %v246
    %v248 = vpop.f32.mrb[0].mxu0
    %249 = vdwg.mxu0
    %v250 = vld [vmem:[#allocation10] sm:$0xff]
    %v251 = vld [vmem:[#allocation10 + $0x8] sm:$0xff]
    %v252 = vld [vmem:[#allocation10 + $0x10] sm:$0xff]
    %v253 = vld [vmem:[#allocation10 + $0x18] sm:$0xff]
    %v254 = vld [vmem:[#allocation10 + $0x20] sm:$0xff]
    %v255 = vld [vmem:[#allocation10 + $0x28] sm:$0xff]
    %v256 = vld [vmem:[#allocation10 + $0x30] sm:$0xff]
    %v257 = vld [vmem:[#allocation10 + $0x38] sm:$0xff]
    %v258 = vld [vmem:[#allocation10 + $0x40] sm:$0xff]
    %v259 = vld [vmem:[#allocation10 + $0x48] sm:$0xff]
    %v260 = vld [vmem:[#allocation10 + $0x50] sm:$0xff]
    %v261 = vld [vmem:[#allocation10 + $0x58] sm:$0xff]
    %v262 = vld [vmem:[#allocation10 + $0x60] sm:$0xff]
    %v263 = vld [vmem:[#allocation10 + $0x68] sm:$0xff]
    %v264 = vld [vmem:[#allocation10 + $0x70] sm:$0xff]
    %v265 = vld [vmem:[#allocation10 + $0x78] sm:$0xff]
    %266 = vmatprep.subr.mxu0 0.0
    %267 = vmatpush1.msra.mxu0 %v250
    %268 = vmatprep.subr.mxu0 0.0
    %269 = vmatpush1.msra.mxu0 %v251
    %270 = vmatprep.subr.mxu0 0.0
    %271 = vmatpush1.msra.mxu0 %v252
    %272 = vmatprep.subr.mxu0 0.0
    %273 = vmatpush1.msra.mxu0 %v253
    %274 = vmatprep.subr.mxu0 0.0
    %275 = vmatpush1.msra.mxu0 %v254
    %276 = vmatprep.subr.mxu0 0.0
    %277 = vmatpush1.msra.mxu0 %v255
    %278 = vmatprep.subr.mxu0 0.0
    %279 = vmatpush1.msra.mxu0 %v256
    %280 = vmatprep.subr.mxu0 0.0
    %281 = vmatpush1.msra.mxu0 %v257
    %282 = vmatprep.subr.mxu0 0.0
    %283 = vmatpush1.msra.mxu0 %v258
    %284 = vmatprep.subr.mxu0 0.0
    %285 = vmatpush1.msra.mxu0 %v259
    %286 = vmatprep.subr.mxu0 0.0
    %287 = vmatpush1.msra.mxu0 %v260
    %288 = vmatprep.subr.mxu0 0.0
    %289 = vmatpush1.msra.mxu0 %v261
    %290 = vmatprep.subr.mxu0 0.0
    %291 = vmatpush1.msra.mxu0 %v262
    %292 = vmatprep.subr.mxu0 0.0
    %293 = vmatpush1.msra.mxu0 %v263
    %294 = vmatprep.subr.mxu0 0.0
    %295 = vmatpush1.msra.mxu0 %v264
    %296 = vmatprep.subr.mxu0 0.0
    %297 = vmatpush1.msra.mxu0 %v265
    %298 = vmatprep.subr.mxu0 0.0
    %299 = vmatpush1.msra.mxu0 0.0
    %300 = vmatprep.subr.mxu0 0.0
    %301 = vmatpush1.msra.mxu0 0.0
    %302 = vmatprep.subr.mxu0 0.0
    %303 = vmatpush1.msra.mxu0 0.0
    %304 = vmatprep.subr.mxu0 0.0
    %305 = vmatpush1.msra.mxu0 0.0
    %306 = vmatprep.subr.mxu0 0.0
    %307 = vmatpush1.msra.mxu0 0.0
    %308 = vmatprep.subr.mxu0 0.0
    %309 = vmatpush1.msra.mxu0 0.0
    %310 = vmatprep.subr.mxu0 0.0
    %311 = vmatpush1.msra.mxu0 0.0
    %312 = vmatprep.subr.mxu0 0.0
    %313 = vmatpush1.msra.mxu0 0.0
    %314 = vmatprep.subr.mxu0 0.0
    %315 = vmatpush1.msra.mxu0 0.0
    %316 = vmatprep.subr.mxu0 0.0
    %317 = vmatpush1.msra.mxu0 0.0
    %318 = vmatprep.subr.mxu0 0.0
    %319 = vmatpush1.msra.mxu0 0.0
    %320 = vmatprep.subr.mxu0 0.0
    %321 = vmatpush1.msra.mxu0 0.0
    %322 = vmatprep.subr.mxu0 0.0
    %323 = vmatpush1.msra.mxu0 0.0
    %324 = vmatprep.subr.mxu0 0.0
    %325 = vmatpush1.msra.mxu0 0.0
    %326 = vmatprep.subr.mxu0 0.0
    %327 = vmatpush1.msra.mxu0 0.0
    %328 = vmatprep.subr.mxu0 0.0
    %329 = vmatpush1.msra.mxu0 0.0
    %330 = vmatprep.mubr.f32.mxu0 0.0
    %331 = vmatmul.mubr.f32.gmra.mrb[0].mxu0 %v156
    %v332 = vpop.f32.mrb[0].mxu0
    %v333 = vadd.f32 0.0, %v332
    %v334 = vpop.f32.mrb[0].mxu0
    %335 = vmatprep.mubr.f32.mxu0 0.0
    %336 = vmatmul.mubr.f32.gmra.mrb[0].mxu0 %v157
    %v337 = vpop.f32.mrb[0].mxu0
    %v338 = vadd.f32 0.0, %v337
    %v339 = vpop.f32.mrb[0].mxu0
    %340 = vmatprep.mubr.f32.mxu0 0.0
    %341 = vmatmul.mubr.f32.gmra.mrb[0].mxu0 %v158
    %v342 = vpop.f32.mrb[0].mxu0
    %v343 = vadd.f32 0.0, %v342
    %v344 = vpop.f32.mrb[0].mxu0
    %345 = vmatprep.mubr.f32.mxu0 0.0
    %346 = vmatmul.mubr.f32.gmra.mrb[0].mxu0 %v159
    %v347 = vpop.f32.mrb[0].mxu0
    %v348 = vadd.f32 0.0, %v347
    %v349 = vpop.f32.mrb[0].mxu0
    %350 = vmatprep.mubr.f32.mxu0 0.0
    %351 = vmatmul.mubr.f32.gmra.mrb[0].mxu0 %v160
    %v352 = vpop.f32.mrb[0].mxu0
    %v353 = vadd.f32 0.0, %v352
    %v354 = vpop.f32.mrb[0].mxu0
    %355 = vmatprep.mubr.f32.mxu0 0.0
    %356 = vmatmul.mubr.f32.gmra.mrb[0].mxu0 %v161
    %v357 = vpop.f32.mrb[0].mxu0
    %v358 = vadd.f32 0.0, %v357
    %v359 = vpop.f32.mrb[0].mxu0
    %360 = vmatprep.mubr.f32.mxu0 0.0
    %361 = vmatmul.mubr.f32.gmra.mrb[0].mxu0 %v162
    %v362 = vpop.f32.mrb[0].mxu0
    %v363 = vadd.f32 0.0, %v362
    %v364 = vpop.f32.mrb[0].mxu0
    %365 = vmatprep.mubr.f32.mxu0 0.0
    %366 = vmatmul.mubr.f32.gmra.mrb[0].mxu0 %v163
    %v367 = vpop.f32.mrb[0].mxu0
    %v368 = vadd.f32 0.0, %v367
    %v369 = vpop.f32.mrb[0].mxu0
    %370 = vdwg.mxu0
    %v371 = vadd.f32 %v333, %v247
    %v372 = vadd.f32 %v338, %v247
    %v373 = vadd.f32 %v343, %v247
    %v374 = vadd.f32 %v348, %v247
    %v375 = vadd.f32 %v353, %v247
    %v376 = vadd.f32 %v358, %v247
    %v377 = vadd.f32 %v363, %v247
    %v378 = vadd.f32 %v368, %v247
    %v379 = vld [vmem:[%s5] sm:$0x1]
    %v381 = vlaneseq
    %v382 = vshrl.u32 %v381, 7
    %v383 = vsub.s32 0, %v382
    %v384 = vrot.slane %v379, %v383
    %v386 = vadd.f32 %v371, %v384
    %v387 = vadd.f32 %v372, %v384
    %v388 = vadd.f32 %v373, %v384
    %v389 = vadd.f32 %v374, %v384
    %v390 = vadd.f32 %v375, %v384
    %v391 = vadd.f32 %v376, %v384
    %v392 = vadd.f32 %v377, %v384
    %v393 = vadd.f32 %v378, %v384
    %v394 = vlaneseq
    %v395 = vshrl.u32 %v394, 7
    %vm396 = vcmp.lt.s32.totalorder %v395, 2
    %v397 = vsel %vm396, 1, 0
    %vm398 = vcmp.eq.s32.totalorder %v397, 1
    %v399 = vsel %vm398, %v386, -1e+30
    %v400 = vsel %vm398, %v387, -1e+30
    %v401 = vsel %vm398, %v388, -1e+30
    %v402 = vsel %vm398, %v389, -1e+30
    %v403 = vsel %vm398, %v390, -1e+30
    %v404 = vsel %vm398, %v391, -1e+30
    %v405 = vsel %vm398, %v392, -1e+30
    %v406 = vsel %vm398, %v393, -1e+30
    %v407 = vrot.slane %v399, 4
    %v408 = vmax.f32 %v399, %v407
    %v409 = vrot.slane %v408, 2
    %v410 = vmax.f32 %v408, %v409
    %v411 = vrot.slane %v410, 1
    %v412 = vmax.f32 %v410, %v411
    %v413 = vrot.slane %v400, 4
    %v414 = vmax.f32 %v400, %v413
    %v415 = vrot.slane %v414, 2
    %v416 = vmax.f32 %v414, %v415
    %v417 = vrot.slane %v416, 1
    %v418 = vmax.f32 %v416, %v417
    %v419 = vrot.slane %v401, 4
    %v420 = vmax.f32 %v401, %v419
    %v421 = vrot.slane %v420, 2
    %v422 = vmax.f32 %v420, %v421
    %v423 = vrot.slane %v422, 1
    %v424 = vmax.f32 %v422, %v423
    %v425 = vrot.slane %v402, 4
    %v426 = vmax.f32 %v402, %v425
    %v427 = vrot.slane %v426, 2
    %v428 = vmax.f32 %v426, %v427
    %v429 = vrot.slane %v428, 1
    %v430 = vmax.f32 %v428, %v429
    %v431 = vrot.slane %v403, 4
    %v432 = vmax.f32 %v403, %v431
    %v433 = vrot.slane %v432, 2
    %v434 = vmax.f32 %v432, %v433
    %v435 = vrot.slane %v434, 1
    %v436 = vmax.f32 %v434, %v435
    %v437 = vrot.slane %v404, 4
    %v438 = vmax.f32 %v404, %v437
    %v439 = vrot.slane %v438, 2
    %v440 = vmax.f32 %v438, %v439
    %v441 = vrot.slane %v440, 1
    %v442 = vmax.f32 %v440, %v441
    %v443 = vrot.slane %v405, 4
    %v444 = vmax.f32 %v405, %v443
    %v445 = vrot.slane %v444, 2
    %v446 = vmax.f32 %v444, %v445
    %v447 = vrot.slane %v446, 1
    %v448 = vmax.f32 %v446, %v447
    %v449 = vrot.slane %v406, 4
    %v450 = vmax.f32 %v406, %v449
    %v451 = vrot.slane %v450, 2
    %v452 = vmax.f32 %v450, %v451
    %v453 = vrot.slane %v452, 1
    %v454 = vmax.f32 %v452, %v453
    %v455 = vsub.f32 %v399, %v412
    %v456 = vsub.f32 %v400, %v418
    %v457 = vsub.f32 %v401, %v424
    %v458 = vsub.f32 %v402, %v430
    %v459 = vsub.f32 %v403, %v436
    %v460 = vsub.f32 %v404, %v442
    %v461 = vsub.f32 %v405, %v448
    %v462 = vsub.f32 %v406, %v454
    %v463 = vmul.f32 %v455, 1.442695
    %v464 = vpow.pop %v463
    %v465 = vmul.f32 %v456, 1.442695
    %v466 = vpow.pop %v465
    %v467 = vmul.f32 %v457, 1.442695
    %v468 = vpow.pop %v467
    %v469 = vmul.f32 %v458, 1.442695
    %v470 = vpow.pop %v469
    %v471 = vmul.f32 %v459, 1.442695
    %v472 = vpow.pop %v471
    %v473 = vmul.f32 %v460, 1.442695
    %v474 = vpow.pop %v473
    %v475 = vmul.f32 %v461, 1.442695
    %v476 = vpow.pop %v475
    %v477 = vmul.f32 %v462, 1.442695
    %v478 = vpow.pop %v477
    %v479 = vrot.slane %v464, 4
    %v480 = vadd.f32 %v464, %v479
    %v481 = vrot.slane %v480, 2
    %v482 = vadd.f32 %v480, %v481
    %v483 = vrot.slane %v482, 1
    %v484 = vadd.f32 %v482, %v483
    %v485 = vrot.slane %v466, 4
    %v486 = vadd.f32 %v466, %v485
    %v487 = vrot.slane %v486, 2
    %v488 = vadd.f32 %v486, %v487
    %v489 = vrot.slane %v488, 1
    %v490 = vadd.f32 %v488, %v489
    %v491 = vrot.slane %v468, 4
    %v492 = vadd.f32 %v468, %v491
    %v493 = vrot.slane %v492, 2
    %v494 = vadd.f32 %v492, %v493
    %v495 = vrot.slane %v494, 1
    %v496 = vadd.f32 %v494, %v495
    %v497 = vrot.slane %v470, 4
    %v498 = vadd.f32 %v470, %v497
    %v499 = vrot.slane %v498, 2
    %v500 = vadd.f32 %v498, %v499
    %v501 = vrot.slane %v500, 1
    %v502 = vadd.f32 %v500, %v501
    %v503 = vrot.slane %v472, 4
    %v504 = vadd.f32 %v472, %v503
    %v505 = vrot.slane %v504, 2
    %v506 = vadd.f32 %v504, %v505
    %v507 = vrot.slane %v506, 1
    %v508 = vadd.f32 %v506, %v507
    %v509 = vrot.slane %v474, 4
    %v510 = vadd.f32 %v474, %v509
    %v511 = vrot.slane %v510, 2
    %v512 = vadd.f32 %v510, %v511
    %v513 = vrot.slane %v512, 1
    %v514 = vadd.f32 %v512, %v513
    %v515 = vrot.slane %v476, 4
    %v516 = vadd.f32 %v476, %v515
    %v517 = vrot.slane %v516, 2
    %v518 = vadd.f32 %v516, %v517
    %v519 = vrot.slane %v518, 1
    %v520 = vadd.f32 %v518, %v519
    %v521 = vrot.slane %v478, 4
    %v522 = vadd.f32 %v478, %v521
    %v523 = vrot.slane %v522, 2
    %v524 = vadd.f32 %v522, %v523
    %v525 = vrot.slane %v524, 1
    %v526 = vadd.f32 %v524, %v525
    %v527 = vrcp.pop %v484
    %v528 = vmul.f32 1.0, %v527
    %v529 = vrcp.pop %v490
    %v530 = vmul.f32 1.0, %v529
    %v531 = vrcp.pop %v496
    %v532 = vmul.f32 1.0, %v531
    %v533 = vrcp.pop %v502
    %v534 = vmul.f32 1.0, %v533
    %v535 = vrcp.pop %v508
    %v536 = vmul.f32 1.0, %v535
    %v537 = vrcp.pop %v514
    %v538 = vmul.f32 1.0, %v537
    %v539 = vrcp.pop %v520
    %v540 = vmul.f32 1.0, %v539
    %v541 = vrcp.pop %v526
    %v542 = vmul.f32 1.0, %v541
    %v543 = vmul.f32 %v464, %v528
    %v544 = vmul.f32 %v466, %v530
    %v545 = vmul.f32 %v468, %v532
    %v546 = vmul.f32 %v470, %v534
    %v547 = vmul.f32 %v472, %v536
    %v548 = vmul.f32 %v474, %v538
    %v549 = vmul.f32 %v476, %v540
    %v550 = vmul.f32 %v478, %v542
    %v551 = vld [vmem:[%s6] sm:$0x1]
    %v553 = vlaneseq
    %v554 = vshrl.u32 %v553, 7
    %v555 = vsub.s32 0, %v554
    %v556 = vrot.slane %v551, %v555
    %v558 = vmul.f32 %v543, %v556
    %v559 = vmul.f32 %v544, %v556
    %v560 = vmul.f32 %v545, %v556
    %v561 = vmul.f32 %v546, %v556
    %v562 = vmul.f32 %v547, %v556
    %v563 = vmul.f32 %v548, %v556
    %v564 = vmul.f32 %v549, %v556
    %v565 = vmul.f32 %v550, %v556
    %566 = vadd.xlane.f32.xlu0 %v558
    %v567 = vpop.xlane.xlu0 %566
    %568 = vadd.xlane.f32.xlu0 %v559
    %v569 = vpop.xlane.xlu0 %568
    %570 = vadd.xlane.f32.xlu0 %v560
    %v571 = vpop.xlane.xlu0 %570
    %572 = vadd.xlane.f32.xlu0 %v561
    %v573 = vpop.xlane.xlu0 %572
    %574 = vadd.xlane.f32.xlu0 %v562
    %v575 = vpop.xlane.xlu0 %574
    %576 = vadd.xlane.f32.xlu0 %v563
    %v577 = vpop.xlane.xlu0 %576
    %578 = vadd.xlane.f32.xlu0 %v564
    %v579 = vpop.xlane.xlu0 %578
    %580 = vadd.xlane.f32.xlu0 %v565
    %v581 = vpop.xlane.xlu0 %580
    %v582 = vmax.f32 %v567, 0.0
    %v583 = vmax.f32 %v569, 0.0
    %v584 = vmax.f32 %v571, 0.0
    %v585 = vmax.f32 %v573, 0.0
    %v586 = vmax.f32 %v575, 0.0
    %v587 = vmax.f32 %v577, 0.0
    %v588 = vmax.f32 %v579, 0.0
    %v589 = vmax.f32 %v581, 0.0
    %v598 = vlaneseq
    %v599 = vand.u32 %v598, 127
    %v600 = vlaneseq
    %v601 = vshrl.u32 %v600, 7
    %v602 = vsub.s32 %v599, %v601
    %v603 = vrot.slane %v582, %v602
    %v604 = vlaneseq
    %v605 = vshrl.u32 %v604, 7
    %v606 = vsub.s32 %v599, %v605
    %v607 = vrot.slane %v583, %v606
    %v608 = vlaneseq
    %v609 = vshrl.u32 %v608, 7
    %v610 = vsub.s32 %v599, %v609
    %v611 = vrot.slane %v584, %v610
    %v612 = vlaneseq
    %v613 = vshrl.u32 %v612, 7
    %v614 = vsub.s32 %v599, %v613
    %v615 = vrot.slane %v585, %v614
    %v616 = vlaneseq
    %v617 = vshrl.u32 %v616, 7
    %v618 = vsub.s32 %v599, %v617
    %v619 = vrot.slane %v586, %v618
    %v620 = vlaneseq
    %v621 = vshrl.u32 %v620, 7
    %v622 = vsub.s32 %v599, %v621
    %v623 = vrot.slane %v587, %v622
    %v624 = vlaneseq
    %v625 = vshrl.u32 %v624, 7
    %v626 = vsub.s32 %v599, %v625
    %v627 = vrot.slane %v588, %v626
    %v628 = vlaneseq
    %v629 = vshrl.u32 %v628, 7
    %v630 = vsub.s32 %v599, %v629
    %v631 = vrot.slane %v589, %v630
    %vm632 = vcmask 1041409
    %v633 = vsel %vm632, %v607, %v603
    %vm634 = vcmask 1042434
    %v635 = vsel %vm634, %v611, %v633
    %vm636 = vcmask 1043459
    %v637 = vsel %vm636, %v615, %v635
    %vm638 = vcmask 1044484
    %v639 = vsel %vm638, %v619, %v637
    %vm640 = vcmask 1045509
    %v641 = vsel %vm640, %v623, %v639
    %vm642 = vcmask 1046534
    %v643 = vsel %vm642, %v627, %v641
    %vm644 = vcmask 1047559
    %v645 = vsel %vm644, %v631, %v643
    %vm647 = vcmask 64512
    %648 = vst.msk [vmem:[#allocation19] sm:$0xff] %vm647, %v645
    %v649 = vmul.f32 %v582, %v156
    %v650 = vmul.f32 %v583, %v157
    %v651 = vmul.f32 %v584, %v158
    %v652 = vmul.f32 %v585, %v159
    %v653 = vmul.f32 %v586, %v160
    %v654 = vmul.f32 %v587, %v161
    %v655 = vmul.f32 %v588, %v162
    %v656 = vmul.f32 %v589, %v163
    %v657 = vadd.f32 %v649, %v650
    %v658 = vadd.f32 %v657, %v651
    %v659 = vadd.f32 %v658, %v652
    %v660 = vadd.f32 %v659, %v653
    %v661 = vadd.f32 %v660, %v654
    %v662 = vadd.f32 %v661, %v655
    %v663 = vadd.f32 %v662, %v656
    %v664 = vld [vmem:[#allocation11] sm:$0xff]
    %v665 = vld [vmem:[#allocation11 + $0x8] sm:$0xff]
    %v666 = vld [vmem:[#allocation11 + $0x10] sm:$0xff]
    %v667 = vld [vmem:[#allocation11 + $0x18] sm:$0xff]
    %v668 = vld [vmem:[#allocation11 + $0x20] sm:$0xff]
    %v669 = vld [vmem:[#allocation11 + $0x28] sm:$0xff]
    %v670 = vld [vmem:[#allocation11 + $0x30] sm:$0xff]
    %v671 = vld [vmem:[#allocation11 + $0x38] sm:$0xff]
    %v672 = vld [vmem:[#allocation11 + $0x40] sm:$0xff]
    %v673 = vld [vmem:[#allocation11 + $0x48] sm:$0xff]
    %v674 = vld [vmem:[#allocation11 + $0x50] sm:$0xff]
    %v675 = vld [vmem:[#allocation11 + $0x58] sm:$0xff]
    %v676 = vld [vmem:[#allocation11 + $0x60] sm:$0xff]
    %v677 = vld [vmem:[#allocation11 + $0x68] sm:$0xff]
    %v678 = vld [vmem:[#allocation11 + $0x70] sm:$0xff]
    %v679 = vld [vmem:[#allocation11 + $0x78] sm:$0xff]
    %v680 = vld [vmem:[#allocation11 + $0x80] sm:$0xff]
    %v681 = vld [vmem:[#allocation11 + $0x88] sm:$0xff]
    %v682 = vld [vmem:[#allocation11 + $0x90] sm:$0xff]
    %v683 = vld [vmem:[#allocation11 + $0x98] sm:$0xff]
    %v684 = vld [vmem:[#allocation11 + $0xa0] sm:$0xff]
    %v685 = vld [vmem:[#allocation11 + $0xa8] sm:$0xff]
    %v686 = vld [vmem:[#allocation11 + $0xb0] sm:$0xff]
    %v687 = vld [vmem:[#allocation11 + $0xb8] sm:$0xff]
    %v688 = vld [vmem:[#allocation11 + $0xc0] sm:$0xff]
    %v689 = vld [vmem:[#allocation11 + $0xc8] sm:$0xff]
    %v690 = vld [vmem:[#allocation11 + $0xd0] sm:$0xff]
    %v691 = vld [vmem:[#allocation11 + $0xd8] sm:$0xff]
    %v692 = vld [vmem:[#allocation11 + $0xe0] sm:$0xff]
    %v693 = vld [vmem:[#allocation11 + $0xe8] sm:$0xff]
    %v694 = vld [vmem:[#allocation11 + $0xf0] sm:$0xff]
    %v695 = vld [vmem:[#allocation11 + $0xf8] sm:$0xff]
    %v696 = vld [vmem:[#allocation11 + $0x100] sm:$0xff]
    %v697 = vld [vmem:[#allocation11 + $0x108] sm:$0xff]
    %v698 = vld [vmem:[#allocation11 + $0x110] sm:$0xff]
    %v699 = vld [vmem:[#allocation11 + $0x118] sm:$0xff]
    %v700 = vld [vmem:[#allocation11 + $0x120] sm:$0xff]
    %v701 = vld [vmem:[#allocation11 + $0x128] sm:$0xff]
    %v702 = vld [vmem:[#allocation11 + $0x130] sm:$0xff]
    %v703 = vld [vmem:[#allocation11 + $0x138] sm:$0xff]
    %v704 = vld [vmem:[#allocation11 + $0x140] sm:$0xff]
    %v705 = vld [vmem:[#allocation11 + $0x148] sm:$0xff]
    %v706 = vld [vmem:[#allocation11 + $0x150] sm:$0xff]
    %v707 = vld [vmem:[#allocation11 + $0x158] sm:$0xff]
    %v708 = vld [vmem:[#allocation11 + $0x160] sm:$0xff]
    %v709 = vld [vmem:[#allocation11 + $0x168] sm:$0xff]
    %v710 = vld [vmem:[#allocation11 + $0x170] sm:$0xff]
    %v711 = vld [vmem:[#allocation11 + $0x178] sm:$0xff]
    %v712 = vld [vmem:[#allocation11 + $0x180] sm:$0xff]
    %v713 = vld [vmem:[#allocation11 + $0x188] sm:$0xff]
    %v714 = vld [vmem:[#allocation11 + $0x190] sm:$0xff]
    %v715 = vld [vmem:[#allocation11 + $0x198] sm:$0xff]
    %v716 = vld [vmem:[#allocation11 + $0x1a0] sm:$0xff]
    %v717 = vld [vmem:[#allocation11 + $0x1a8] sm:$0xff]
    %v718 = vld [vmem:[#allocation11 + $0x1b0] sm:$0xff]
    %v719 = vld [vmem:[#allocation11 + $0x1b8] sm:$0xff]
    %v720 = vld [vmem:[#allocation11 + $0x1c0] sm:$0xff]
    %v721 = vld [vmem:[#allocation11 + $0x1c8] sm:$0xff]
    %v722 = vld [vmem:[#allocation11 + $0x1d0] sm:$0xff]
    %v723 = vld [vmem:[#allocation11 + $0x1d8] sm:$0xff]
    %v724 = vld [vmem:[#allocation11 + $0x1e0] sm:$0xff]
    %v725 = vld [vmem:[#allocation11 + $0x1e8] sm:$0xff]
    %v726 = vld [vmem:[#allocation11 + $0x1f0] sm:$0xff]
    %v727 = vld [vmem:[#allocation11 + $0x1f8] sm:$0xff]
    %v728 = vld [vmem:[#allocation11 + $0x200] sm:$0xff]
    %v729 = vld [vmem:[#allocation11 + $0x208] sm:$0xff]
    %v730 = vld [vmem:[#allocation11 + $0x210] sm:$0xff]
    %v731 = vld [vmem:[#allocation11 + $0x218] sm:$0xff]
    %v732 = vld [vmem:[#allocation11 + $0x220] sm:$0xff]
    %v733 = vld [vmem:[#allocation11 + $0x228] sm:$0xff]
    %v734 = vld [vmem:[#allocation11 + $0x230] sm:$0xff]
    %v735 = vld [vmem:[#allocation11 + $0x238] sm:$0xff]
    %v736 = vld [vmem:[#allocation11 + $0x240] sm:$0xff]
    %v737 = vld [vmem:[#allocation11 + $0x248] sm:$0xff]
    %v738 = vld [vmem:[#allocation11 + $0x250] sm:$0xff]
    %v739 = vld [vmem:[#allocation11 + $0x258] sm:$0xff]
    %v740 = vld [vmem:[#allocation11 + $0x260] sm:$0xff]
    %v741 = vld [vmem:[#allocation11 + $0x268] sm:$0xff]
    %v742 = vld [vmem:[#allocation11 + $0x270] sm:$0xff]
    %v743 = vld [vmem:[#allocation11 + $0x278] sm:$0xff]
    %v744 = vld [vmem:[#allocation11 + $0x280] sm:$0xff]
    %v745 = vld [vmem:[#allocation11 + $0x288] sm:$0xff]
    %v746 = vld [vmem:[#allocation11 + $0x290] sm:$0xff]
    %v747 = vld [vmem:[#allocation11 + $0x298] sm:$0xff]
    %v748 = vld [vmem:[#allocation11 + $0x2a0] sm:$0xff]
    %v749 = vld [vmem:[#allocation11 + $0x2a8] sm:$0xff]
    %v750 = vld [vmem:[#allocation11 + $0x2b0] sm:$0xff]
    %v751 = vld [vmem:[#allocation11 + $0x2b8] sm:$0xff]
    %v752 = vld [vmem:[#allocation11 + $0x2c0] sm:$0xff]
    %v753 = vld [vmem:[#allocation11 + $0x2c8] sm:$0xff]
    %v754 = vld [vmem:[#allocation11 + $0x2d0] sm:$0xff]
    %v755 = vld [vmem:[#allocation11 + $0x2d8] sm:$0xff]
    %v756 = vld [vmem:[#allocation11 + $0x2e0] sm:$0xff]
    %v757 = vld [vmem:[#allocation11 + $0x2e8] sm:$0xff]
    %v758 = vld [vmem:[#allocation11 + $0x2f0] sm:$0xff]
    %v759 = vld [vmem:[#allocation11 + $0x2f8] sm:$0xff]
    %v760 = vld [vmem:[%s9] sm:$0x7]
    %v762 = vlaneseq
    %v763 = vshrl.u32 %v762, 7
    %v764 = vsub.s32 0, %v763
    %v765 = vrot.slane %v760, %v764
    %v766 = vlaneseq
    %v767 = vshrl.u32 %v766, 7
    %v768 = vsub.s32 1, %v767
    %v769 = vrot.slane %v760, %v768
    %v770 = vlaneseq
    %v771 = vshrl.u32 %v770, 7
    %v772 = vsub.s32 2, %v771
    %v773 = vrot.slane %v760, %v772
    %777 = vmatprep.subr.mxu0 %v665
    %778 = vmatpush1.msra.mxu0 %v664
    %779 = vmatprep.subr.mxu0 %v668
    %780 = vmatpush1.msra.mxu0 %v667
    %781 = vmatprep.subr.mxu0 %v671
    %782 = vmatpush1.msra.mxu0 %v670
    %783 = vmatprep.subr.mxu0 %v674
    %784 = vmatpush1.msra.mxu0 %v673
    %785 = vmatprep.subr.mxu0 %v677
    %786 = vmatpush1.msra.mxu0 %v676
    %787 = vmatprep.subr.mxu0 %v680
    %788 = vmatpush1.msra.mxu0 %v679
    %789 = vmatprep.subr.mxu0 %v683
    %790 = vmatpush1.msra.mxu0 %v682
    %791 = vmatprep.subr.mxu0 %v686
    %792 = vmatpush1.msra.mxu0 %v685
    %793 = vmatprep.subr.mxu0 %v689
    %794 = vmatpush1.msra.mxu0 %v688
    %795 = vmatprep.subr.mxu0 %v692
    %796 = vmatpush1.msra.mxu0 %v691
    %797 = vmatprep.subr.mxu0 %v695
    %798 = vmatpush1.msra.mxu0 %v694
    %799 = vmatprep.subr.mxu0 %v698
    %800 = vmatpush1.msra.mxu0 %v697
    %801 = vmatprep.subr.mxu0 %v701
    %802 = vmatpush1.msra.mxu0 %v700
    %803 = vmatprep.subr.mxu0 %v704
    %804 = vmatpush1.msra.mxu0 %v703
    %805 = vmatprep.subr.mxu0 %v707
    %806 = vmatpush1.msra.mxu0 %v706
    %807 = vmatprep.subr.mxu0 %v710
    %808 = vmatpush1.msra.mxu0 %v709
    %809 = vmatprep.subr.mxu0 %v713
    %810 = vmatpush1.msra.mxu0 %v712
    %811 = vmatprep.subr.mxu0 %v716
    %812 = vmatpush1.msra.mxu0 %v715
    %813 = vmatprep.subr.mxu0 %v719
    %814 = vmatpush1.msra.mxu0 %v718
    %815 = vmatprep.subr.mxu0 %v722
    %816 = vmatpush1.msra.mxu0 %v721
    %817 = vmatprep.subr.mxu0 %v725
    %818 = vmatpush1.msra.mxu0 %v724
    %819 = vmatprep.subr.mxu0 %v728
    %820 = vmatpush1.msra.mxu0 %v727
    %821 = vmatprep.subr.mxu0 %v731
    %822 = vmatpush1.msra.mxu0 %v730
    %823 = vmatprep.subr.mxu0 %v734
    %824 = vmatpush1.msra.mxu0 %v733
    %825 = vmatprep.subr.mxu0 %v737
    %826 = vmatpush1.msra.mxu0 %v736
    %827 = vmatprep.subr.mxu0 %v740
    %828 = vmatpush1.msra.mxu0 %v739
    %829 = vmatprep.subr.mxu0 %v743
    %830 = vmatpush1.msra.mxu0 %v742
    %831 = vmatprep.subr.mxu0 %v746
    %832 = vmatpush1.msra.mxu0 %v745
    %833 = vmatprep.subr.mxu0 %v749
    %834 = vmatpush1.msra.mxu0 %v748
    %835 = vmatprep.subr.mxu0 %v752
    %836 = vmatpush1.msra.mxu0 %v751
    %837 = vmatprep.subr.mxu0 %v755
    %838 = vmatpush1.msra.mxu0 %v754
    %839 = vmatprep.subr.mxu0 %v758
    %840 = vmatpush1.msra.mxu0 %v757
    %841 = vmatprep.mubr.f32.mxu0 %v663
    %842 = vmatmul.mubr.f32.gmra.mrb[0].mxu0 %v154
    %v843 = vpop.f32.mrb[0].mxu0
    %v844 = vadd.f32 %v765, %v843
    %v845 = vpop.f32.mrb[0].mxu0
    %v846 = vadd.f32 %v769, %v845
    %847 = vdwg.mxu0
    %848 = vmatprep.subr.mxu0 0.0
    %849 = vmatpush1.msra.mxu0 %v666
    %850 = vmatprep.subr.mxu0 0.0
    %851 = vmatpush1.msra.mxu0 %v669
    %852 = vmatprep.subr.mxu0 0.0
    %853 = vmatpush1.msra.mxu0 %v672
    %854 = vmatprep.subr.mxu0 0.0
    %855 = vmatpush1.msra.mxu0 %v675
    %856 = vmatprep.subr.mxu0 0.0
    %857 = vmatpush1.msra.mxu0 %v678
    %858 = vmatprep.subr.mxu0 0.0
    %859 = vmatpush1.msra.mxu0 %v681
    %860 = vmatprep.subr.mxu0 0.0
    %861 = vmatpush1.msra.mxu0 %v684
    %862 = vmatprep.subr.mxu0 0.0
    %863 = vmatpush1.msra.mxu0 %v687
    %864 = vmatprep.subr.mxu0 0.0
    %865 = vmatpush1.msra.mxu0 %v690
    %866 = vmatprep.subr.mxu0 0.0
    %867 = vmatpush1.msra.mxu0 %v693
    %868 = vmatprep.subr.mxu0 0.0
    %869 = vmatpush1.msra.mxu0 %v696
    %870 = vmatprep.subr.mxu0 0.0
    %871 = vmatpush1.msra.mxu0 %v699
    %872 = vmatprep.subr.mxu0 0.0
    %873 = vmatpush1.msra.mxu0 %v702
    %874 = vmatprep.subr.mxu0 0.0
    %875 = vmatpush1.msra.mxu0 %v705
    %876 = vmatprep.subr.mxu0 0.0
    %877 = vmatpush1.msra.mxu0 %v708
    %878 = vmatprep.subr.mxu0 0.0
    %879 = vmatpush1.msra.mxu0 %v711
    %880 = vmatprep.subr.mxu0 0.0
    %881 = vmatpush1.msra.mxu0 %v714
    %882 = vmatprep.subr.mxu0 0.0
    %883 = vmatpush1.msra.mxu0 %v717
    %884 = vmatprep.subr.mxu0 0.0
    %885 = vmatpush1.msra.mxu0 %v720
    %886 = vmatprep.subr.mxu0 0.0
    %887 = vmatpush1.msra.mxu0 %v723
    %888 = vmatprep.subr.mxu0 0.0
    %889 = vmatpush1.msra.mxu0 %v726
    %890 = vmatprep.subr.mxu0 0.0
    %891 = vmatpush1.msra.mxu0 %v729
    %892 = vmatprep.subr.mxu0 0.0
    %893 = vmatpush1.msra.mxu0 %v732
    %894 = vmatprep.subr.mxu0 0.0
    %895 = vmatpush1.msra.mxu0 %v735
    %896 = vmatprep.subr.mxu0 0.0
    %897 = vmatpush1.msra.mxu0 %v738
    %898 = vmatprep.subr.mxu0 0.0
    %899 = vmatpush1.msra.mxu0 %v741
    %900 = vmatprep.subr.mxu0 0.0
    %901 = vmatpush1.msra.mxu0 %v744
    %902 = vmatprep.subr.mxu0 0.0
    %903 = vmatpush1.msra.mxu0 %v747
    %904 = vmatprep.subr.mxu0 0.0
    %905 = vmatpush1.msra.mxu0 %v750
    %906 = vmatprep.subr.mxu0 0.0
    %907 = vmatpush1.msra.mxu0 %v753
    %908 = vmatprep.subr.mxu0 0.0
    %909 = vmatpush1.msra.mxu0 %v756
    %910 = vmatprep.subr.mxu0 0.0
    %911 = vmatpush1.msra.mxu0 %v759
    %912 = vmatprep.mubr.f32.mxu0 %v663
    %913 = vmatmul.mubr.f32.gmra.mrb[0].mxu0 %v154
    %v914 = vpop.f32.mrb[0].mxu0
    %v915 = vadd.f32 %v773, %v914
    %v916 = vpop.f32.mrb[0].mxu0
    %917 = vdwg.mxu0
    %v918 = vld [vmem:[#allocation13] sm:$0xff]
    %v919 = vld [vmem:[#allocation13 + $0x8] sm:$0xff]
    %v920 = vld [vmem:[#allocation13 + $0x10] sm:$0xff]
    %v921 = vld [vmem:[#allocation13 + $0x18] sm:$0xff]
    %v922 = vld [vmem:[#allocation13 + $0x20] sm:$0xff]
    %v923 = vld [vmem:[#allocation13 + $0x28] sm:$0xff]
    %v924 = vld [vmem:[#allocation13 + $0x30] sm:$0xff]
    %v925 = vld [vmem:[#allocation13 + $0x38] sm:$0xff]
    %v926 = vld [vmem:[#allocation13 + $0x40] sm:$0xff]
    %v927 = vld [vmem:[#allocation13 + $0x48] sm:$0xff]
    %v928 = vld [vmem:[#allocation13 + $0x50] sm:$0xff]
    %v929 = vld [vmem:[#allocation13 + $0x58] sm:$0xff]
    %v930 = vld [vmem:[#allocation13 + $0x60] sm:$0xff]
    %v931 = vld [vmem:[#allocation13 + $0x68] sm:$0xff]
    %v932 = vld [vmem:[#allocation13 + $0x70] sm:$0xff]
    %v933 = vld [vmem:[#allocation13 + $0x78] sm:$0xff]
    %v934 = vld [vmem:[#allocation13 + $0x80] sm:$0xff]
    %v935 = vld [vmem:[#allocation13 + $0x88] sm:$0xff]
    %v936 = vld [vmem:[#allocation13 + $0x90] sm:$0xff]
    %v937 = vld [vmem:[#allocation13 + $0x98] sm:$0xff]
    %v938 = vld [vmem:[#allocation13 + $0xa0] sm:$0xff]
    %v939 = vld [vmem:[#allocation13 + $0xa8] sm:$0xff]
    %v940 = vld [vmem:[#allocation13 + $0xb0] sm:$0xff]
    %v941 = vld [vmem:[#allocation13 + $0xb8] sm:$0xff]
    %v942 = vld [vmem:[#allocation13 + $0xc0] sm:$0xff]
    %v943 = vld [vmem:[#allocation13 + $0xc8] sm:$0xff]
    %v944 = vld [vmem:[#allocation13 + $0xd0] sm:$0xff]
    %v945 = vld [vmem:[#allocation13 + $0xd8] sm:$0xff]
    %v946 = vld [vmem:[#allocation13 + $0xe0] sm:$0xff]
    %v947 = vld [vmem:[#allocation13 + $0xe8] sm:$0xff]
    %v948 = vld [vmem:[#allocation13 + $0xf0] sm:$0xff]
    %v949 = vld [vmem:[#allocation13 + $0xf8] sm:$0xff]
    %v950 = vld [vmem:[#allocation13 + $0x100] sm:$0xff]
    %v951 = vld [vmem:[#allocation13 + $0x108] sm:$0xff]
    %v952 = vld [vmem:[#allocation13 + $0x110] sm:$0xff]
    %v953 = vld [vmem:[#allocation13 + $0x118] sm:$0xff]
    %v954 = vld [vmem:[#allocation13 + $0x120] sm:$0xff]
    %v955 = vld [vmem:[#allocation13 + $0x128] sm:$0xff]
    %v956 = vld [vmem:[#allocation13 + $0x130] sm:$0xff]
    %v957 = vld [vmem:[#allocation13 + $0x138] sm:$0xff]
    %v958 = vld [vmem:[#allocation13 + $0x140] sm:$0xff]
    %v959 = vld [vmem:[#allocation13 + $0x148] sm:$0xff]
    %v960 = vld [vmem:[#allocation13 + $0x150] sm:$0xff]
    %v961 = vld [vmem:[#allocation13 + $0x158] sm:$0xff]
    %v962 = vld [vmem:[#allocation13 + $0x160] sm:$0xff]
    %v963 = vld [vmem:[#allocation13 + $0x168] sm:$0xff]
    %v964 = vld [vmem:[#allocation13 + $0x170] sm:$0xff]
    %v965 = vld [vmem:[#allocation13 + $0x178] sm:$0xff]
    %v966 = vld [vmem:[%s10] sm:$0x7]
    %v968 = vlaneseq
    %v969 = vshrl.u32 %v968, 7
    %v970 = vsub.s32 0, %v969
    %v971 = vrot.slane %v966, %v970
    %v972 = vlaneseq
    %v973 = vshrl.u32 %v972, 7
    %v974 = vsub.s32 1, %v973
    %v975 = vrot.slane %v966, %v974
    %v976 = vlaneseq
    %v977 = vshrl.u32 %v976, 7
    %v978 = vsub.s32 2, %v977
    %v979 = vrot.slane %v966, %v978
    %983 = vmatprep.subr.mxu0 %v919
    %984 = vmatpush1.msra.mxu0 %v918
    %985 = vmatprep.subr.mxu0 %v922
    %986 = vmatpush1.msra.mxu0 %v921
    %987 = vmatprep.subr.mxu0 %v925
    %988 = vmatpush1.msra.mxu0 %v924
    %989 = vmatprep.subr.mxu0 %v928
    %990 = vmatpush1.msra.mxu0 %v927
    %991 = vmatprep.subr.mxu0 %v931
    %992 = vmatpush1.msra.mxu0 %v930
    %993 = vmatprep.subr.mxu0 %v934
    %994 = vmatpush1.msra.mxu0 %v933
    %995 = vmatprep.subr.mxu0 %v937
    %996 = vmatpush1.msra.mxu0 %v936
    %997 = vmatprep.subr.mxu0 %v940
    %998 = vmatpush1.msra.mxu0 %v939
    %999 = vmatprep.subr.mxu0 %v943
    %1000 = vmatpush1.msra.mxu0 %v942
    %1001 = vmatprep.subr.mxu0 %v946
    %1002 = vmatpush1.msra.mxu0 %v945
    %1003 = vmatprep.subr.mxu0 %v949
    %1004 = vmatpush1.msra.mxu0 %v948
    %1005 = vmatprep.subr.mxu0 %v952
    %1006 = vmatpush1.msra.mxu0 %v951
    %1007 = vmatprep.subr.mxu0 %v955
    %1008 = vmatpush1.msra.mxu0 %v954
    %1009 = vmatprep.subr.mxu0 %v958
    %1010 = vmatpush1.msra.mxu0 %v957
    %1011 = vmatprep.subr.mxu0 %v961
    %1012 = vmatpush1.msra.mxu0 %v960
    %1013 = vmatprep.subr.mxu0 %v964
    %1014 = vmatpush1.msra.mxu0 %v963
    %1015 = vmatprep.subr.mxu0 0.0
    %1016 = vmatpush1.msra.mxu0 0.0
    %1017 = vmatprep.subr.mxu0 0.0
    %1018 = vmatpush1.msra.mxu0 0.0
    %1019 = vmatprep.subr.mxu0 0.0
    %1020 = vmatpush1.msra.mxu0 0.0
    %1021 = vmatprep.subr.mxu0 0.0
    %1022 = vmatpush1.msra.mxu0 0.0
    %1023 = vmatprep.subr.mxu0 0.0
    %1024 = vmatpush1.msra.mxu0 0.0
    %1025 = vmatprep.subr.mxu0 0.0
    %1026 = vmatpush1.msra.mxu0 0.0
    %1027 = vmatprep.subr.mxu0 0.0
    %1028 = vmatpush1.msra.mxu0 0.0
    %1029 = vmatprep.subr.mxu0 0.0
    %1030 = vmatpush1.msra.mxu0 0.0
    %1031 = vmatprep.subr.mxu0 0.0
    %1032 = vmatpush1.msra.mxu0 0.0
    %1033 = vmatprep.subr.mxu0 0.0
    %1034 = vmatpush1.msra.mxu0 0.0
    %1035 = vmatprep.subr.mxu0 0.0
    %1036 = vmatpush1.msra.mxu0 0.0
    %1037 = vmatprep.subr.mxu0 0.0
    %1038 = vmatpush1.msra.mxu0 0.0
    %1039 = vmatprep.subr.mxu0 0.0
    %1040 = vmatpush1.msra.mxu0 0.0
    %1041 = vmatprep.subr.mxu0 0.0
    %1042 = vmatpush1.msra.mxu0 0.0
    %1043 = vmatprep.subr.mxu0 0.0
    %1044 = vmatpush1.msra.mxu0 0.0
    %1045 = vmatprep.subr.mxu0 0.0
    %1046 = vmatpush1.msra.mxu0 0.0
    %1047 = vmatprep.mubr.f32.mxu0 0.0
    %1048 = vmatmul.mubr.f32.gmra.mrb[0].mxu0 %v155
    %v1049 = vpop.f32.mrb[0].mxu0
    %v1050 = vadd.f32 %v971, %v1049
    %v1051 = vpop.f32.mrb[0].mxu0
    %v1052 = vadd.f32 %v975, %v1051
    %1053 = vdwg.mxu0
    %1054 = vmatprep.subr.mxu0 0.0
    %1055 = vmatpush1.msra.mxu0 %v920
    %1056 = vmatprep.subr.mxu0 0.0
    %1057 = vmatpush1.msra.mxu0 %v923
    %1058 = vmatprep.subr.mxu0 0.0
    %1059 = vmatpush1.msra.mxu0 %v926
    %1060 = vmatprep.subr.mxu0 0.0
    %1061 = vmatpush1.msra.mxu0 %v929
    %1062 = vmatprep.subr.mxu0 0.0
    %1063 = vmatpush1.msra.mxu0 %v932
    %1064 = vmatprep.subr.mxu0 0.0
    %1065 = vmatpush1.msra.mxu0 %v935
    %1066 = vmatprep.subr.mxu0 0.0
    %1067 = vmatpush1.msra.mxu0 %v938
    %1068 = vmatprep.subr.mxu0 0.0
    %1069 = vmatpush1.msra.mxu0 %v941
    %1070 = vmatprep.subr.mxu0 0.0
    %1071 = vmatpush1.msra.mxu0 %v944
    %1072 = vmatprep.subr.mxu0 0.0
    %1073 = vmatpush1.msra.mxu0 %v947
    %1074 = vmatprep.subr.mxu0 0.0
    %1075 = vmatpush1.msra.mxu0 %v950
    %1076 = vmatprep.subr.mxu0 0.0
    %1077 = vmatpush1.msra.mxu0 %v953
    %1078 = vmatprep.subr.mxu0 0.0
    %1079 = vmatpush1.msra.mxu0 %v956
    %1080 = vmatprep.subr.mxu0 0.0
    %1081 = vmatpush1.msra.mxu0 %v959
    %1082 = vmatprep.subr.mxu0 0.0
    %1083 = vmatpush1.msra.mxu0 %v962
    %1084 = vmatprep.subr.mxu0 0.0
    %1085 = vmatpush1.msra.mxu0 %v965
    %1086 = vmatprep.subr.mxu0 0.0
    %1087 = vmatpush1.msra.mxu0 0.0
    %1088 = vmatprep.subr.mxu0 0.0
    %1089 = vmatpush1.msra.mxu0 0.0
    %1090 = vmatprep.subr.mxu0 0.0
    %1091 = vmatpush1.msra.mxu0 0.0
    %1092 = vmatprep.subr.mxu0 0.0
    %1093 = vmatpush1.msra.mxu0 0.0
    %1094 = vmatprep.subr.mxu0 0.0
    %1095 = vmatpush1.msra.mxu0 0.0
    %1096 = vmatprep.subr.mxu0 0.0
    %1097 = vmatpush1.msra.mxu0 0.0
    %1098 = vmatprep.subr.mxu0 0.0
    %1099 = vmatpush1.msra.mxu0 0.0
    %1100 = vmatprep.subr.mxu0 0.0
    %1101 = vmatpush1.msra.mxu0 0.0
    %1102 = vmatprep.subr.mxu0 0.0
    %1103 = vmatpush1.msra.mxu0 0.0
    %1104 = vmatprep.subr.mxu0 0.0
    %1105 = vmatpush1.msra.mxu0 0.0
    %1106 = vmatprep.subr.mxu0 0.0
    %1107 = vmatpush1.msra.mxu0 0.0
    %1108 = vmatprep.subr.mxu0 0.0
    %1109 = vmatpush1.msra.mxu0 0.0
    %1110 = vmatprep.subr.mxu0 0.0
    %1111 = vmatpush1.msra.mxu0 0.0
    %1112 = vmatprep.subr.mxu0 0.0
    %1113 = vmatpush1.msra.mxu0 0.0
    %1114 = vmatprep.subr.mxu0 0.0
    %1115 = vmatpush1.msra.mxu0 0.0
    %1116 = vmatprep.subr.mxu0 0.0
    %1117 = vmatpush1.msra.mxu0 0.0
    %1118 = vmatprep.mubr.f32.mxu0 0.0
    %1119 = vmatmul.mubr.f32.gmra.mrb[0].mxu0 %v155
    %v1120 = vpop.f32.mrb[0].mxu0
    %v1121 = vadd.f32 %v979, %v1120
    %v1122 = vpop.f32.mrb[0].mxu0
    %1123 = vdwg.mxu0
    %v1124 = vadd.f32 %v844, %v1050
    %v1125 = vxor.u32 %v1124, 2147483648
    %v1126 = vmul.f32 %v1125, 1.442695
    %v1127 = vpow.pop %v1126
    %v1128 = vadd.f32 %v1127, 1.0
    %v1129 = vrcp.pop %v1128
    %v1130 = vmul.f32 1.0, %v1129
    %v1131 = vadd.f32 %v846, %v1052
    %v1132 = vxor.u32 %v1131, 2147483648
    %v1133 = vmul.f32 %v1132, 1.442695
    %v1134 = vpow.pop %v1133
    %v1135 = vadd.f32 %v1134, 1.0
    %v1136 = vrcp.pop %v1135
    %v1137 = vmul.f32 1.0, %v1136
    %v1138 = vmul.f32 %v1130, %v1121
    %v1139 = vadd.f32 %v915, %v1138
    %v1140 = vtanh.pop %v1139
    %v1141 = vsub.f32 1.0, %v1137
    %v1142 = vmul.f32 %v1141, %v1140
    %v1143 = vmul.f32 %v1137, %v155
    %v1144 = vadd.f32 %v1142, %v1143
    %1145 = vst [vmem:[#allocation17] sm:$0xff] %v1144
    %v1146 = vld [vmem:[#allocation14] sm:$0xff]
    %v1147 = vld [vmem:[#allocation14 + $0x8] sm:$0xff]
    %v1148 = vld [vmem:[#allocation14 + $0x10] sm:$0xff]
    %v1149 = vld [vmem:[#allocation14 + $0x18] sm:$0xff]
    %v1150 = vld [vmem:[#allocation14 + $0x20] sm:$0xff]
    %v1151 = vld [vmem:[#allocation14 + $0x28] sm:$0xff]
    %v1152 = vld [vmem:[#allocation14 + $0x30] sm:$0xff]
    %v1153 = vld [vmem:[#allocation14 + $0x38] sm:$0xff]
    %v1154 = vld [vmem:[#allocation14 + $0x40] sm:$0xff]
    %v1155 = vld [vmem:[#allocation14 + $0x48] sm:$0xff]
    %v1156 = vld [vmem:[#allocation14 + $0x50] sm:$0xff]
    %v1157 = vld [vmem:[#allocation14 + $0x58] sm:$0xff]
    %v1158 = vld [vmem:[#allocation14 + $0x60] sm:$0xff]
    %v1159 = vld [vmem:[#allocation14 + $0x68] sm:$0xff]
    %v1160 = vld [vmem:[#allocation14 + $0x70] sm:$0xff]
    %v1161 = vld [vmem:[#allocation14 + $0x78] sm:$0xff]
    %v1162 = vld [vmem:[#allocation14 + $0x80] sm:$0xff]
    %v1163 = vld [vmem:[#allocation14 + $0x88] sm:$0xff]
    %v1164 = vld [vmem:[#allocation14 + $0x90] sm:$0xff]
    %v1165 = vld [vmem:[#allocation14 + $0x98] sm:$0xff]
    %v1166 = vld [vmem:[#allocation14 + $0xa0] sm:$0xff]
    %v1167 = vld [vmem:[#allocation14 + $0xa8] sm:$0xff]
    %v1168 = vld [vmem:[#allocation14 + $0xb0] sm:$0xff]
    %v1169 = vld [vmem:[#allocation14 + $0xb8] sm:$0xff]
    %v1170 = vld [vmem:[#allocation14 + $0xc0] sm:$0xff]
    %v1171 = vld [vmem:[#allocation14 + $0xc8] sm:$0xff]
    %v1172 = vld [vmem:[#allocation14 + $0xd0] sm:$0xff]
    %v1173 = vld [vmem:[#allocation14 + $0xd8] sm:$0xff]
    %v1174 = vld [vmem:[#allocation14 + $0xe0] sm:$0xff]
    %v1175 = vld [vmem:[#allocation14 + $0xe8] sm:$0xff]
    %v1176 = vld [vmem:[#allocation14 + $0xf0] sm:$0xff]
    %v1177 = vld [vmem:[#allocation14 + $0xf8] sm:$0xff]
    %v1178 = vld [vmem:[%s12] sm:$0x1]
    %v1180 = vlaneseq
    %v1181 = vshrl.u32 %v1180, 7
    %v1182 = vsub.s32 0, %v1181
    %v1183 = vrot.slane %v1178, %v1182
    %1185 = vmatprep.subr.mxu0 0.0
    %1186 = vmatpush1.msra.mxu0 %v1146
    %1187 = vmatprep.subr.mxu0 0.0
    %1188 = vmatpush1.msra.mxu0 %v1147
    %1189 = vmatprep.subr.mxu0 0.0
    %1190 = vmatpush1.msra.mxu0 %v1148
    %1191 = vmatprep.subr.mxu0 0.0
    %1192 = vmatpush1.msra.mxu0 %v1149
    %1193 = vmatprep.subr.mxu0 0.0
    %1194 = vmatpush1.msra.mxu0 %v1150
    %1195 = vmatprep.subr.mxu0 0.0
    %1196 = vmatpush1.msra.mxu0 %v1151
    %1197 = vmatprep.subr.mxu0 0.0
    %1198 = vmatpush1.msra.mxu0 %v1152
    %1199 = vmatprep.subr.mxu0 0.0
    %1200 = vmatpush1.msra.mxu0 %v1153
    %1201 = vmatprep.subr.mxu0 0.0
    %1202 = vmatpush1.msra.mxu0 %v1154
    %1203 = vmatprep.subr.mxu0 0.0
    %1204 = vmatpush1.msra.mxu0 %v1155
    %1205 = vmatprep.subr.mxu0 0.0
    %1206 = vmatpush1.msra.mxu0 %v1156
    %1207 = vmatprep.subr.mxu0 0.0
    %1208 = vmatpush1.msra.mxu0 %v1157
    %1209 = vmatprep.subr.mxu0 0.0
    %1210 = vmatpush1.msra.mxu0 %v1158
    %1211 = vmatprep.subr.mxu0 0.0
    %1212 = vmatpush1.msra.mxu0 %v1159
    %1213 = vmatprep.subr.mxu0 0.0
    %1214 = vmatpush1.msra.mxu0 %v1160
    %1215 = vmatprep.subr.mxu0 0.0
    %1216 = vmatpush1.msra.mxu0 %v1161
    %1217 = vmatprep.subr.mxu0 0.0
    %1218 = vmatpush1.msra.mxu0 %v1162
    %1219 = vmatprep.subr.mxu0 0.0
    %1220 = vmatpush1.msra.mxu0 %v1163
    %1221 = vmatprep.subr.mxu0 0.0
    %1222 = vmatpush1.msra.mxu0 %v1164
    %1223 = vmatprep.subr.mxu0 0.0
    %1224 = vmatpush1.msra.mxu0 %v1165
    %1225 = vmatprep.subr.mxu0 0.0
    %1226 = vmatpush1.msra.mxu0 %v1166
    %1227 = vmatprep.subr.mxu0 0.0
    %1228 = vmatpush1.msra.mxu0 %v1167
    %1229 = vmatprep.subr.mxu0 0.0
    %1230 = vmatpush1.msra.mxu0 %v1168
    %1231 = vmatprep.subr.mxu0 0.0
    %1232 = vmatpush1.msra.mxu0 %v1169
    %1233 = vmatprep.subr.mxu0 0.0
    %1234 = vmatpush1.msra.mxu0 %v1170
    %1235 = vmatprep.subr.mxu0 0.0
    %1236 = vmatpush1.msra.mxu0 %v1171
    %1237 = vmatprep.subr.mxu0 0.0
    %1238 = vmatpush1.msra.mxu0 %v1172
    %1239 = vmatprep.subr.mxu0 0.0
    %1240 = vmatpush1.msra.mxu0 %v1173
    %1241 = vmatprep.subr.mxu0 0.0
    %1242 = vmatpush1.msra.mxu0 %v1174
    %1243 = vmatprep.subr.mxu0 0.0
    %1244 = vmatpush1.msra.mxu0 %v1175
    %1245 = vmatprep.subr.mxu0 0.0
    %1246 = vmatpush1.msra.mxu0 %v1176
    %1247 = vmatprep.subr.mxu0 0.0
    %1248 = vmatpush1.msra.mxu0 %v1177
    %1249 = vmatprep.mubr.f32.mxu0 %v663
    %1250 = vmatmul.mubr.f32.gmra.mrb[0].mxu0 %v1144
    %v1251 = vpop.f32.mrb[0].mxu0
    %v1252 = vadd.f32 %v1183, %v1251
    %v1253 = vpop.f32.mrb[0].mxu0
    %1254 = vdwg.mxu0
    %vm1255 = vcmp.lt.s32.totalorder %v599, 40
    %v1256 = vsel %vm1255, 1, 0
    %vm1257 = vcmp.eq.s32.totalorder %v1256, 1
    %v1258 = vsel %vm1257, %v1252, -1e+30
    %1259 = vmax.xlane.f32.xlu0 %v1258
    %v1260 = vpop.xlane.xlu0 %1259
    %v1261 = vsub.f32 %v1258, %v1260
    %v1262 = vmul.f32 %v1261, 1.442695
    %v1263 = vpow.pop %v1262
    %1264 = vadd.xlane.f32.xlu0 %v1263
    %v1265 = vpop.xlane.xlu0 %1264
    %v1266 = vlog2.pop %v1265
    %v1267 = vmul.f32 %v1266, 0.6931472
    %v1268 = vsub.f32 %v1261, %v1267
    %1269 = vst [vmem:[#allocation16] sm:$0xff] %v1268
    // Predicated region
    $region86: #{tpu_custom_call.1} parent=1 // pred_check
      _
    $region87: #{tpu_custom_call.1} parent=1 // pred_check_branch
      %1271 = sbr.rel (0) target = $region89
    $region88: #{tpu_custom_call.1} parent=1 // pred_region
      %s1273 = ssub.s32 128, 128
      %1274 = vsyncadd [#allocation4], %s1273
      %s1276 = sshll.u32 [#allocation16], 4
      %s1277 = int_to_ptr.vmem [resolvable:$true] %s1276
      %1279 = dma.vmem_to_hbm [thread:$0]  %s1277, 128, %s13, [#allocation4]
    $region89: #{tpu_custom_call.1} parent=1 // pred_fallthru
      _
    // Predicated region
    $region90: #{tpu_custom_call.1} parent=1 // pred_check
      _
    $region91: #{tpu_custom_call.1} parent=1 // pred_check_branch
      %1281 = sbr.rel (0) target = $region93
    $region92: #{tpu_custom_call.1} parent=1 // pred_region
      %s1283 = ssub.s32 128, 128
      %1284 = vsyncadd [#allocation18], %s1283
      %s1286 = sshll.u32 [#allocation17], 4
      %s1287 = int_to_ptr.vmem [resolvable:$true] %s1286
      %1289 = dma.vmem_to_hbm [thread:$0]  %s1287, 128, %s14, [#allocation18]
    $region93: #{tpu_custom_call.1} parent=1 // pred_fallthru
      _
    // Predicated region
    $region94: #{tpu_custom_call.1} parent=1 // pred_check
      _
    $region95: #{tpu_custom_call.1} parent=1 // pred_check_branch
      %1291 = sbr.rel (0) target = $region97
    $region96: #{tpu_custom_call.1} parent=1 // pred_region
      %s1293 = ssub.s32 128, 128
      %1294 = vsyncadd [#allocation18], %s1293
      %s1296 = sshll.u32 [#allocation19], 4
      %s1297 = int_to_ptr.vmem [resolvable:$true] %s1296
      %1299 = dma.vmem_to_hbm [thread:$0]  %s1297, 128, %s15, [#allocation18]
    $region97: #{tpu_custom_call.1} parent=1 // pred_fallthru
      _
    // Predicated region
    $region98: #{tpu_custom_call.1} parent=1 // pred_check
      _
    $region99: #{tpu_custom_call.1} parent=1 // pred_check_branch
      %1301 = sbr.rel (0) target = $region101
    $region100: #{tpu_custom_call.1} parent=1 // pred_region
      %1302 = dma.done [#allocation4], 128
    $region101: #{tpu_custom_call.1} parent=1 // pred_fallthru
      _
    // Predicated region
    $region102: #{tpu_custom_call.1} parent=1 // pred_check
      _
    $region103: #{tpu_custom_call.1} parent=1 // pred_check_branch
      %1304 = sbr.rel (0) target = $region105
    $region104: #{tpu_custom_call.1} parent=1 // pred_region
      %1305 = dma.done [#allocation18], 128
    $region105: #{tpu_custom_call.1} parent=1 // pred_fallthru
      _
    // Predicated region
    $region106: #{tpu_custom_call.1} parent=1 // pred_check
      _
    $region107: #{tpu_custom_call.1} parent=1 // pred_check_branch
      %1307 = sbr.rel (0) target = $region109
    $region108: #{tpu_custom_call.1} parent=1 // pred_region
      %1308 = dma.done [#allocation18], 128
    $region109: #{tpu_custom_call.1} parent=1 // pred_fallthru
      _
    %1309 = vsyncpa [#allocation3], 1
    %1310 = vsyncpa [#allocation6], 1
    %1311 = vsyncpa [#allocation9], 1
    %1312 = vsyncpa [#allocation12], 1
    %1313 = vsyncpa [#allocation15], 1
    %1314 = vsyncpa [#allocation4], 1
    %1315 = vsyncpa [#allocation18], 1

</llo_original>
